<compile_context>
chip_gen: v6e
topology: v6e:2x2x1
jax: 0.10.0
libtpu: 0.0.40
codegen_flags: <defaults>
</compile_context>

<pallas_src>
from functools import partial

import jax
import jax.numpy as jnp
from jax.experimental import pallas as pl
from jax.experimental.pallas import tpu as pltpu  # noqa: F401  (TPU backend)

_WIDTH = 128  # lane width of the packed parameter slab


# --------------------------- Param slab layout ----------------------------- #
def _round8(n):
    return (n + 7) // 8 * 8


def _param_layout(A, D, S, E, H):
    """Row offsets (all multiples of 8) of each weight inside the packed slab."""
    names_rows = (("w0", A), ("w1", D), ("wih", E), ("whh", H),
                  ("wa", A), ("ws", S), ("wh", H))
    offs, off = {}, 0
    for name, rows in names_rows:
        offs[name] = off
        off += _round8(rows)
    offs["bias"] = off           # 8 bias rows: [b0 | b1 | bih | bhh | bc | pad]
    off += 8
    return offs, off


# ----------------------------- Pallas kernel ------------------------------- #
def aux_emotion_kernel(tm_ref, spk_ref, enc_ref, par_ref, out_ref, *, dims):
    """
    tm_ref  : (B, A)        torchmoji_hidden
    spk_ref : (B, S)        speaker_embed
    enc_ref : (T*B, E)      encoder_outputs, time-major rows (t*B + b)
    par_ref : (R, 128)      packed weights + biases (see _param_layout)
    out_ref : (B, C+2L)     [log_softmax(prob_energies) | zu_params]
    """
    B, T, A, D, S, E, H, C, L = dims
    H3 = 3 * H
    C2L = C + 2 * L
    f32 = jnp.float32

    # Build-time guards: every packed row must fit inside the 128-lane slab.
    assert max(D, A, H3, C2L) <= _WIDTH, "packed slab lane overflow"
    assert tm_ref.shape == (B, A) and spk_ref.shape == (B, S)
    assert enc_ref.shape == (T * B, E)

    offs, total = _param_layout(A, D, S, E, H)
    assert par_ref.shape == (total, _WIDTH)

    # ---- unpack weights/biases (static slices; offsets are multiples of 8) --
    w0 = par_ref[offs["w0"]:offs["w0"] + A, 0:D]
    w1 = par_ref[offs["w1"]:offs["w1"] + D, 0:A]
    wih = par_ref[offs["wih"]:offs["wih"] + E, 0:H3]
    whh = par_ref[offs["whh"]:offs["whh"] + H, 0:H3]
    wa = par_ref[offs["wa"]:offs["wa"] + A, 0:C2L]
    ws = par_ref[offs["ws"]:offs["ws"] + S, 0:C2L]
    wh = par_ref[offs["wh"]:offs["wh"] + H, 0:C2L]
    bo = offs["bias"]
    b0 = par_ref[bo + 0:bo + 1, 0:D]
    b1 = par_ref[bo + 1:bo + 2, 0:A]
    bih = par_ref[bo + 2:bo + 3, 0:H3]
    bhh = par_ref[bo + 3:bo + 4, 0:H3]
    bc = par_ref[bo + 4:bo + 5, 0:C2L]

    # ---------------- seq_layers MLP on torchmoji_hidden --------------------
    x = tm_ref[...].astype(f32)
    h0 = jnp.dot(x, w0, preferred_element_type=f32) + b0
    h0 = jnp.maximum(h0, 0.05 * h0)                       # LeakyReLU(0.05)
    ref_out = jnp.dot(h0, w1, preferred_element_type=f32) + b1

    # -------- classifier partial (h-independent, hoisted off serial chain) --
    spk = spk_ref[...].astype(f32)
    cls_partial = (jnp.dot(ref_out, wa, preferred_element_type=f32)
                   + jnp.dot(spk, ws, preferred_element_type=f32)
                   + bc)                                   # (B, C + 2L)

    # ---------------- GRU over encoder_outputs (final hidden state) ---------
    # One fused MXU matmul for all T input projections.
    enc_tb = enc_ref[...].astype(f32)                      # (T*B, E)
    xg_all = jnp.dot(enc_tb, wih, preferred_element_type=f32) + bih  # (T*B, 3H)

    bhh_b = jnp.broadcast_to(bhh, (B, H3))                 # hoisted broadcast
    h = jnp.zeros((B, H), f32)
    for t in range(T):                                     # static unroll (T=8)
        xg = xg_all[t * B:(t + 1) * B, :]                  # static sublane rows
        hg = jnp.dot(h, whh, preferred_element_type=f32) + bhh_b
        s = jax.nn.sigmoid(xg[:, 0:2 * H] + hg[:, 0:2 * H])   # one EUP pass
        r = s[:, 0:H]
        z = s[:, H:2 * H]
        n = jnp.tanh(xg[:, 2 * H:H3] + r * hg[:, 2 * H:H3])
        h = (1.0 - z) * n + z * h

    # ---------------- finish classifier + log_softmax -----------------------
    cat_out = cls_partial + jnp.dot(h, wh, preferred_element_type=f32)

    pe = cat_out[:, 0:C]
    zu = cat_out[:, C:C2L]
    m = jnp.max(pe, axis=-1, keepdims=True)
    sh = pe - m
    lse = jnp.log(jnp.sum(jnp.exp(sh), axis=-1, keepdims=True))
    out_ref[...] = jnp.concatenate([sh - lse, zu], axis=-1)   # single store


# ------------------------------ Wrapper ------------------------------------ #
@partial(jax.jit,
         static_argnames=("n_classes", "latent_dim", "mlp_dim", "rnn_dim"))
def aux_emotion_net_forward(params, torchmoji_hidden, speaker_embed,
                            encoder_outputs, *, n_classes, latent_dim,
                            mlp_dim, rnn_dim):
    """Mirrors AuxEmotionNet.forward in eval mode (text_lengths=None)."""
    B, T, E = encoder_outputs.shape
    A = torchmoji_hidden.shape[1]
    S = speaker_embed.shape[1]
    C2L = n_classes + 2 * latent_dim

    # Time-major rows so the kernel can do ONE fused input-projection matmul.
    enc_tb = jnp.transpose(encoder_outputs, (1, 0, 2)).reshape(T * B, E)

    dims = (B, T, A, mlp_dim, S, E, rnn_dim, n_classes, latent_dim)
    out = pl.pallas_call(
        partial(aux_emotion_kernel, dims=dims),
        out_shape=jax.ShapeDtypeStruct((B, C2L), jnp.float32),
    )(torchmoji_hidden, speaker_embed, enc_tb, params["slab"])

    # Glue: matches torch [:, None] and chunk(2, dim=2); fused under jit.
    aux_zs = out[:, None, :n_classes]                      # (B, 1, n_classes)
    aux_zu_params = out[:, None, n_classes:]               # (B, 1, 2*latent)
    aux_zu_mu = aux_zu_params[:, :, :latent_dim]
    aux_zu_logvar = aux_zu_params[:, :, latent_dim:]
    return aux_zs, aux_zu_mu, aux_zu_logvar, aux_zu_params


# --------------------- Parameter creation / packing ------------------------ #
def make_params(key, A, D, S, E, H, n_classes, latent_dim):
    """Pre-transposed / pre-fused parameters packed into one (R, 128) slab.

    Mapping from PyTorch:
      wih = GRU.weight_ih_l0.T  (E, 3H), column blocks in gate order r|z|n
      whh = GRU.weight_hh_l0.T  (H, 3H)
      wa/ws/wh = row-chunks of latent_classifier_layer.weight.T for the
                 [ref | speaker | rnn] input concat; output cols [C | 2L].
    Returns a dict with the packed "slab" (kernel input) and the raw arrays
    (used only by the pure-JAX reference).
    """
    ks = iter(jax.random.split(key, 16))

    def w(shape, scale=0.1):
        return (scale * jax.random.normal(next(ks), shape)).astype(jnp.float32)

    H3 = 3 * H
    C2L = n_classes + 2 * latent_dim
    assert max(D, A, H3, C2L) <= _WIDTH, "dims exceed 128-lane packed slab"

    raw = {
        # seq_layers: Linear(A, D) -> LeakyReLU(0.05) -> Linear(D, A)
        "w0": w((A, D)), "w1": w((D, A)),
        # GRU(E, H), fused gate weights (columns r|z|n)
        "wih": w((E, H3)), "whh": w((H, H3)),
        # latent_classifier_layer, row-split by input chunk, fused output cols
        "wa": w((A, C2L)), "ws": w((S, C2L)), "wh": w((H, C2L)),
        "b0": w((D,)), "b1": w((A,)),
        "bih": w((H3,)), "bhh": w((H3,)),
        "bc": w((C2L,)),
    }

    offs, total = _param_layout(A, D, S, E, H)
    slab = jnp.zeros((total, _WIDTH), jnp.float32)
    for name in ("w0", "w1", "wih", "whh", "wa", "ws", "wh"):
        a = raw[name]
        slab = slab.at[offs[name]:offs[name] + a.shape[0], 0:a.shape[1]].set(a)
    bo = offs["bias"]
    for i, bn in enumerate(("b0", "b1", "bih", "bhh", "bc")):
        b = raw[bn]
        slab = slab.at[bo + i, 0:b.shape[0]].set(b)

    out = dict(raw)
    out["slab"] = slab
    return out


# ------------------------- Pure-JAX reference ------------------------------ #
def reference_forward(params, tm, spk, enc, *, n_classes, latent_dim):
    H = params["whh"].shape[0]

    h0 = tm @ params["w0"] + params["b0"]
    h0 = jnp.where(h0 >= 0, h0, 0.05 * h0)
    ref = h0 @ params["w1"] + params["b1"]

    B, T, E = enc.shape
    h = jnp.zeros((B, H), jnp.float32)
    for t in range(T):
        xg = enc[:, t] @ params["wih"] + params["bih"]
        hg = h @ params["whh"] + params["bhh"]
        r = jax.nn.sigmoid(xg[:, :H] + hg[:, :H])
        z = jax.nn.sigmoid(xg[:, H:2 * H] + hg[:, H:2 * H])
        n = jnp.tanh(xg[:, 2 * H:] + r * hg[:, 2 * H:])
        h = (1 - z) * n + z * h

    cat = (ref @ params["wa"] + spk @ params["ws"] + h @ params["wh"]
           + params["bc"])
    pe, zu = cat[:, :n_classes], cat[:, n_classes:]
    zs = jax.nn.log_softmax(pe, axis=-1)
    return (zs[:, None], zu[:, None, :latent_dim],
            zu[:, None, latent_dim:], zu[:, None])


# --------------------------------- Main ------------------------------------ #
if __name__ == "__main__":
    # small hparams: torchMoji_attDim=64, auxemotionnet_layer_dims=[32, 32],
    # speaker_embedding_dim=16, encoder_LSTM_dim=32, auxemotionnet_RNN_dim=32,
    # 8 emotion classes, emotionnet_latent_dim=16
    B, T = 2, 8
    A, D, S, E, H = 64, 32, 16, 32, 32
    n_classes, latent_dim = 8, 16

    key = jax.random.PRNGKey(0)
    k_tm, k_spk, k_enc, k_par = jax.random.split(key, 4)

    torchmoji_hidden = jax.random.normal(k_tm, (B, A), dtype=jnp.float32)
    speaker_embed = jax.random.normal(k_spk, (B, S), dtype=jnp.float32)
    encoder_outputs = jax.random.normal(k_enc, (B, T, E), dtype=jnp.float32)

    params = make_params(k_par, A, D, S, E, H, n_classes, latent_dim)

    aux_zs, aux_zu_mu, aux_zu_logvar, aux_zu_params = aux_emotion_net_forward(
        params, torchmoji_hidden, speaker_embed, encoder_outputs,
        n_classes=n_classes, latent_dim=latent_dim, mlp_dim=D, rnn_dim=H)
    jax.block_until_ready((aux_zs, aux_zu_mu, aux_zu_logvar, aux_zu_params))

    assert aux_zs.shape == (B, 1, n_classes)
    assert aux_zu_mu.shape == (B, 1, latent_dim)
    assert aux_zu_logvar.shape == (B, 1, latent_dim)
    assert aux_zu_params.shape == (B, 1, 2 * latent_dim)

    # Correctness check against a pure-JAX reference of the same math.
    r_zs, r_mu, r_lv, r_zu = reference_forward(
        params, torchmoji_hidden, speaker_embed, encoder_outputs,
        n_classes=n_classes, latent_dim=latent_dim)
    for got, want in ((aux_zs, r_zs), (aux_zu_mu, r_mu),
                      (aux_zu_logvar, r_lv), (aux_zu_params, r_zu)):
        assert jnp.allclose(got, want, atol=1e-3, rtol=1e-3)

    # TODO(synk): training-mode dropout branches (encoder_outputs_dropout,
    # classifier_layer_dropout) and pack_padded_sequence per-sequence-length
    # masking are skipped (eval mode, text_lengths=None) to match the PyTorch
    # eval forward path.
    print("KERNEL_OK")
</pallas_src>

<mosaic_0001>
module attributes {stable_mosaic.version = 11 : i64} {
  func.func @aux_emotion_kernel(%arg0: memref<2x64xf32, #tpu.memory_space<vmem>>, %arg1: memref<2x16xf32, #tpu.memory_space<vmem>>, %arg2: memref<16x32xf32, #tpu.memory_space<vmem>>, %arg3: memref<280x128xf32, #tpu.memory_space<vmem>>, %arg4: memref<2x40xf32, #tpu.memory_space<vmem>>) attributes {dimension_semantics = [], scalar_prefetch = 0 : i64, scratch_operands = 0 : i64, tpu.core_type = #tpu.core_type<tc>} {
    %c0 = arith.constant 0 : index
    %c0_0 = arith.constant 0 : index
    %0 = vector.load %arg3[%c0, %c0_0] : memref<280x128xf32, #tpu.memory_space<vmem>>, vector<64x32xf32>
    %c64 = arith.constant 64 : index
    %c0_1 = arith.constant 0 : index
    %1 = vector.load %arg3[%c64, %c0_1] : memref<280x128xf32, #tpu.memory_space<vmem>>, vector<32x64xf32>
    %c96 = arith.constant 96 : index
    %c0_2 = arith.constant 0 : index
    %2 = vector.load %arg3[%c96, %c0_2] : memref<280x128xf32, #tpu.memory_space<vmem>>, vector<32x96xf32>
    %c128 = arith.constant 128 : index
    %c0_3 = arith.constant 0 : index
    %3 = vector.load %arg3[%c128, %c0_3] : memref<280x128xf32, #tpu.memory_space<vmem>>, vector<32x96xf32>
    %c160 = arith.constant 160 : index
    %c0_4 = arith.constant 0 : index
    %4 = vector.load %arg3[%c160, %c0_4] : memref<280x128xf32, #tpu.memory_space<vmem>>, vector<64x40xf32>
    %c224 = arith.constant 224 : index
    %c0_5 = arith.constant 0 : index
    %5 = vector.load %arg3[%c224, %c0_5] : memref<280x128xf32, #tpu.memory_space<vmem>>, vector<16x40xf32>
    %c240 = arith.constant 240 : index
    %c0_6 = arith.constant 0 : index
    %6 = vector.load %arg3[%c240, %c0_6] : memref<280x128xf32, #tpu.memory_space<vmem>>, vector<32x40xf32>
    %c272 = arith.constant 272 : index
    %c0_7 = arith.constant 0 : index
    %7 = vector.load %arg3[%c272, %c0_7] : memref<280x128xf32, #tpu.memory_space<vmem>>, vector<1x32xf32>
    %c273 = arith.constant 273 : index
    %c0_8 = arith.constant 0 : index
    %8 = vector.load %arg3[%c273, %c0_8] : memref<280x128xf32, #tpu.memory_space<vmem>>, vector<1x64xf32>
    %c274 = arith.constant 274 : index
    %c0_9 = arith.constant 0 : index
    %9 = vector.load %arg3[%c274, %c0_9] : memref<280x128xf32, #tpu.memory_space<vmem>>, vector<1x96xf32>
    %c275 = arith.constant 275 : index
    %c0_10 = arith.constant 0 : index
    %10 = vector.load %arg3[%c275, %c0_10] : memref<280x128xf32, #tpu.memory_space<vmem>>, vector<1x96xf32>
    %c276 = arith.constant 276 : index
    %c0_11 = arith.constant 0 : index
    %11 = vector.load %arg3[%c276, %c0_11] : memref<280x128xf32, #tpu.memory_space<vmem>>, vector<1x40xf32>
    %c0_12 = arith.constant 0 : index
    %c0_13 = arith.constant 0 : index
    %12 = vector.load %arg0[%c0_12, %c0_13] : memref<2x64xf32, #tpu.memory_space<vmem>>, vector<2x64xf32>
    %cst = arith.constant dense<0.000000e+00> : vector<2x32xf32>
    %13 = tpu.matmul %12, %0, %cst {dimension_numbers = #tpu.dot_dimension_numbers<[1], [0], [0], [1], [0, 0, 1, 1], [], []>} : vector<2x64xf32>, vector<64x32xf32>, vector<2x32xf32> -> vector<2x32xf32>
    %14 = vector.broadcast %7 : vector<1x32xf32> to vector<2x32xf32>
    %15 = arith.addf %13, %14 : vector<2x32xf32>
    %cst_14 = arith.constant 5.000000e-02 : f32
    %16 = vector.broadcast %cst_14 : f32 to vector<2x32xf32>
    %17 = arith.mulf %16, %15 : vector<2x32xf32>
    %18 = arith.maximumf %15, %17 : vector<2x32xf32>
    %cst_15 = arith.constant dense<0.000000e+00> : vector<2x64xf32>
    %19 = tpu.matmul %18, %1, %cst_15 {dimension_numbers = #tpu.dot_dimension_numbers<[1], [0], [0], [1], [0, 0, 1, 1], [], []>} : vector<2x32xf32>, vector<32x64xf32>, vector<2x64xf32> -> vector<2x64xf32>
    %20 = vector.broadcast %8 : vector<1x64xf32> to vector<2x64xf32>
    %21 = arith.addf %19, %20 : vector<2x64xf32>
    %c0_16 = arith.constant 0 : index
    %c0_17 = arith.constant 0 : index
    %22 = vector.load %arg1[%c0_16, %c0_17] : memref<2x16xf32, #tpu.memory_space<vmem>>, vector<2x16xf32>
    %cst_18 = arith.constant dense<0.000000e+00> : vector<2x40xf32>
    %23 = tpu.matmul %21, %4, %cst_18 {dimension_numbers = #tpu.dot_dimension_numbers<[1], [0], [0], [1], [0, 0, 1, 1], [], []>} : vector<2x64xf32>, vector<64x40xf32>, vector<2x40xf32> -> vector<2x40xf32>
    %cst_19 = arith.constant dense<0.000000e+00> : vector<2x40xf32>
    %24 = tpu.matmul %22, %5, %cst_19 {dimension_numbers = #tpu.dot_dimension_numbers<[1], [0], [0], [1], [0, 0, 1, 1], [], []>} : vector<2x16xf32>, vector<16x40xf32>, vector<2x40xf32> -> vector<2x40xf32>
    %25 = arith.addf %23, %24 : vector<2x40xf32>
    %26 = vector.broadcast %11 : vector<1x40xf32> to vector<2x40xf32>
    %27 = arith.addf %25, %26 : vector<2x40xf32>
    %c0_20 = arith.constant 0 : index
    %c0_21 = arith.constant 0 : index
    %28 = vector.load %arg2[%c0_20, %c0_21] : memref<16x32xf32, #tpu.memory_space<vmem>>, vector<16x32xf32>
    %cst_22 = arith.constant dense<0.000000e+00> : vector<16x96xf32>
    %29 = tpu.matmul %28, %2, %cst_22 {dimension_numbers = #tpu.dot_dimension_numbers<[1], [0], [0], [1], [0, 0, 1, 1], [], []>} : vector<16x32xf32>, vector<32x96xf32>, vector<16x96xf32> -> vector<16x96xf32>
    %30 = vector.broadcast %9 : vector<1x96xf32> to vector<16x96xf32>
    %31 = arith.addf %29, %30 : vector<16x96xf32>
    %32 = vector.shape_cast %10 : vector<1x96xf32> to vector<1x96xf32>
    %33 = vector.broadcast %32 : vector<1x96xf32> to vector<2x96xf32>
    %cst_23 = arith.constant 0.000000e+00 : f32
    %34 = vector.broadcast %cst_23 : f32 to vector<2x32xf32>
    %35 = vector.extract_strided_slice %31 {offsets = [0, 0], sizes = [2, 96], strides = [1, 1]} : vector<16x96xf32> to vector<2x96xf32>
    %cst_24 = arith.constant dense<0.000000e+00> : vector<2x96xf32>
    %36 = tpu.matmul %34, %3, %cst_24 {dimension_numbers = #tpu.dot_dimension_numbers<[1], [0], [0], [1], [0, 0, 1, 1], [], []>} : vector<2x32xf32>, vector<32x96xf32>, vector<2x96xf32> -> vector<2x96xf32>
    %37 = arith.addf %36, %33 : vector<2x96xf32>
    %38 = vector.extract_strided_slice %35 {offsets = [0, 0], sizes = [2, 64], strides = [1, 1]} : vector<2x96xf32> to vector<2x64xf32>
    %39 = vector.extract_strided_slice %37 {offsets = [0, 0], sizes = [2, 64], strides = [1, 1]} : vector<2x96xf32> to vector<2x64xf32>
    %40 = arith.addf %38, %39 : vector<2x64xf32>
    %41 = arith.negf %40 : vector<2x64xf32>
    %42 = math.exp %41 : vector<2x64xf32>
    %cst_25 = arith.constant 1.000000e+00 : f32
    %43 = vector.broadcast %cst_25 : f32 to vector<2x64xf32>
    %44 = arith.addf %43, %42 : vector<2x64xf32>
    %45 = arith.divf %43, %44 : vector<2x64xf32>
    %46 = vector.extract_strided_slice %45 {offsets = [0, 0], sizes = [2, 32], strides = [1, 1]} : vector<2x64xf32> to vector<2x32xf32>
    %47 = vector.extract_strided_slice %45 {offsets = [0, 32], sizes = [2, 32], strides = [1, 1]} : vector<2x64xf32> to vector<2x32xf32>
    %48 = vector.extract_strided_slice %35 {offsets = [0, 64], sizes = [2, 32], strides = [1, 1]} : vector<2x96xf32> to vector<2x32xf32>
    %49 = vector.extract_strided_slice %37 {offsets = [0, 64], sizes = [2, 32], strides = [1, 1]} : vector<2x96xf32> to vector<2x32xf32>
    %50 = arith.mulf %46, %49 : vector<2x32xf32>
    %51 = arith.addf %48, %50 : vector<2x32xf32>
    %52 = math.tanh %51 : vector<2x32xf32>
    %cst_26 = arith.constant 1.000000e+00 : f32
    %53 = vector.broadcast %cst_26 : f32 to vector<2x32xf32>
    %54 = arith.subf %53, %47 : vector<2x32xf32>
    %55 = arith.mulf %54, %52 : vector<2x32xf32>
    %56 = arith.mulf %47, %34 : vector<2x32xf32>
    %57 = arith.addf %55, %56 : vector<2x32xf32>
    %58 = vector.extract_strided_slice %31 {offsets = [2, 0], sizes = [2, 96], strides = [1, 1]} : vector<16x96xf32> to vector<2x96xf32>
    %cst_27 = arith.constant dense<0.000000e+00> : vector<2x96xf32>
    %59 = tpu.matmul %57, %3, %cst_27 {dimension_numbers = #tpu.dot_dimension_numbers<[1], [0], [0], [1], [0, 0, 1, 1], [], []>} : vector<2x32xf32>, vector<32x96xf32>, vector<2x96xf32> -> vector<2x96xf32>
    %60 = arith.addf %59, %33 : vector<2x96xf32>
    %61 = vector.extract_strided_slice %58 {offsets = [0, 0], sizes = [2, 64], strides = [1, 1]} : vector<2x96xf32> to vector<2x64xf32>
    %62 = vector.extract_strided_slice %60 {offsets = [0, 0], sizes = [2, 64], strides = [1, 1]} : vector<2x96xf32> to vector<2x64xf32>
    %63 = arith.addf %61, %62 : vector<2x64xf32>
    %64 = arith.negf %63 : vector<2x64xf32>
    %65 = math.exp %64 : vector<2x64xf32>
    %cst_28 = arith.constant 1.000000e+00 : f32
    %66 = vector.broadcast %cst_28 : f32 to vector<2x64xf32>
    %67 = arith.addf %66, %65 : vector<2x64xf32>
    %68 = arith.divf %66, %67 : vector<2x64xf32>
    %69 = vector.extract_strided_slice %68 {offsets = [0, 0], sizes = [2, 32], strides = [1, 1]} : vector<2x64xf32> to vector<2x32xf32>
    %70 = vector.extract_strided_slice %68 {offsets = [0, 32], sizes = [2, 32], strides = [1, 1]} : vector<2x64xf32> to vector<2x32xf32>
    %71 = vector.extract_strided_slice %58 {offsets = [0, 64], sizes = [2, 32], strides = [1, 1]} : vector<2x96xf32> to vector<2x32xf32>
    %72 = vector.extract_strided_slice %60 {offsets = [0, 64], sizes = [2, 32], strides = [1, 1]} : vector<2x96xf32> to vector<2x32xf32>
    %73 = arith.mulf %69, %72 : vector<2x32xf32>
    %74 = arith.addf %71, %73 : vector<2x32xf32>
    %75 = math.tanh %74 : vector<2x32xf32>
    %cst_29 = arith.constant 1.000000e+00 : f32
    %76 = vector.broadcast %cst_29 : f32 to vector<2x32xf32>
    %77 = arith.subf %76, %70 : vector<2x32xf32>
    %78 = arith.mulf %77, %75 : vector<2x32xf32>
    %79 = arith.mulf %70, %57 : vector<2x32xf32>
    %80 = arith.addf %78, %79 : vector<2x32xf32>
    %81 = vector.extract_strided_slice %31 {offsets = [4, 0], sizes = [2, 96], strides = [1, 1]} : vector<16x96xf32> to vector<2x96xf32>
    %cst_30 = arith.constant dense<0.000000e+00> : vector<2x96xf32>
    %82 = tpu.matmul %80, %3, %cst_30 {dimension_numbers = #tpu.dot_dimension_numbers<[1], [0], [0], [1], [0, 0, 1, 1], [], []>} : vector<2x32xf32>, vector<32x96xf32>, vector<2x96xf32> -> vector<2x96xf32>
    %83 = arith.addf %82, %33 : vector<2x96xf32>
    %84 = vector.extract_strided_slice %81 {offsets = [0, 0], sizes = [2, 64], strides = [1, 1]} : vector<2x96xf32> to vector<2x64xf32>
    %85 = vector.extract_strided_slice %83 {offsets = [0, 0], sizes = [2, 64], strides = [1, 1]} : vector<2x96xf32> to vector<2x64xf32>
    %86 = arith.addf %84, %85 : vector<2x64xf32>
    %87 = arith.negf %86 : vector<2x64xf32>
    %88 = math.exp %87 : vector<2x64xf32>
    %cst_31 = arith.constant 1.000000e+00 : f32
    %89 = vector.broadcast %cst_31 : f32 to vector<2x64xf32>
    %90 = arith.addf %89, %88 : vector<2x64xf32>
    %91 = arith.divf %89, %90 : vector<2x64xf32>
    %92 = vector.extract_strided_slice %91 {offsets = [0, 0], sizes = [2, 32], strides = [1, 1]} : vector<2x64xf32> to vector<2x32xf32>
    %93 = vector.extract_strided_slice %91 {offsets = [0, 32], sizes = [2, 32], strides = [1, 1]} : vector<2x64xf32> to vector<2x32xf32>
    %94 = vector.extract_strided_slice %81 {offsets = [0, 64], sizes = [2, 32], strides = [1, 1]} : vector<2x96xf32> to vector<2x32xf32>
    %95 = vector.extract_strided_slice %83 {offsets = [0, 64], sizes = [2, 32], strides = [1, 1]} : vector<2x96xf32> to vector<2x32xf32>
    %96 = arith.mulf %92, %95 : vector<2x32xf32>
    %97 = arith.addf %94, %96 : vector<2x32xf32>
    %98 = math.tanh %97 : vector<2x32xf32>
    %cst_32 = arith.constant 1.000000e+00 : f32
    %99 = vector.broadcast %cst_32 : f32 to vector<2x32xf32>
    %100 = arith.subf %99, %93 : vector<2x32xf32>
    %101 = arith.mulf %100, %98 : vector<2x32xf32>
    %102 = arith.mulf %93, %80 : vector<2x32xf32>
    %103 = arith.addf %101, %102 : vector<2x32xf32>
    %104 = vector.extract_strided_slice %31 {offsets = [6, 0], sizes = [2, 96], strides = [1, 1]} : vector<16x96xf32> to vector<2x96xf32>
    %cst_33 = arith.constant dense<0.000000e+00> : vector<2x96xf32>
    %105 = tpu.matmul %103, %3, %cst_33 {dimension_numbers = #tpu.dot_dimension_numbers<[1], [0], [0], [1], [0, 0, 1, 1], [], []>} : vector<2x32xf32>, vector<32x96xf32>, vector<2x96xf32> -> vector<2x96xf32>
    %106 = arith.addf %105, %33 : vector<2x96xf32>
    %107 = vector.extract_strided_slice %104 {offsets = [0, 0], sizes = [2, 64], strides = [1, 1]} : vector<2x96xf32> to vector<2x64xf32>
    %108 = vector.extract_strided_slice %106 {offsets = [0, 0], sizes = [2, 64], strides = [1, 1]} : vector<2x96xf32> to vector<2x64xf32>
    %109 = arith.addf %107, %108 : vector<2x64xf32>
    %110 = arith.negf %109 : vector<2x64xf32>
    %111 = math.exp %110 : vector<2x64xf32>
    %cst_34 = arith.constant 1.000000e+00 : f32
    %112 = vector.broadcast %cst_34 : f32 to vector<2x64xf32>
    %113 = arith.addf %112, %111 : vector<2x64xf32>
    %114 = arith.divf %112, %113 : vector<2x64xf32>
    %115 = vector.extract_strided_slice %114 {offsets = [0, 0], sizes = [2, 32], strides = [1, 1]} : vector<2x64xf32> to vector<2x32xf32>
    %116 = vector.extract_strided_slice %114 {offsets = [0, 32], sizes = [2, 32], strides = [1, 1]} : vector<2x64xf32> to vector<2x32xf32>
    %117 = vector.extract_strided_slice %104 {offsets = [0, 64], sizes = [2, 32], strides = [1, 1]} : vector<2x96xf32> to vector<2x32xf32>
    %118 = vector.extract_strided_slice %106 {offsets = [0, 64], sizes = [2, 32], strides = [1, 1]} : vector<2x96xf32> to vector<2x32xf32>
    %119 = arith.mulf %115, %118 : vector<2x32xf32>
    %120 = arith.addf %117, %119 : vector<2x32xf32>
    %121 = math.tanh %120 : vector<2x32xf32>
    %cst_35 = arith.constant 1.000000e+00 : f32
    %122 = vector.broadcast %cst_35 : f32 to vector<2x32xf32>
    %123 = arith.subf %122, %116 : vector<2x32xf32>
    %124 = arith.mulf %123, %121 : vector<2x32xf32>
    %125 = arith.mulf %116, %103 : vector<2x32xf32>
    %126 = arith.addf %124, %125 : vector<2x32xf32>
    %127 = vector.extract_strided_slice %31 {offsets = [8, 0], sizes = [2, 96], strides = [1, 1]} : vector<16x96xf32> to vector<2x96xf32>
    %cst_36 = arith.constant dense<0.000000e+00> : vector<2x96xf32>
    %128 = tpu.matmul %126, %3, %cst_36 {dimension_numbers = #tpu.dot_dimension_numbers<[1], [0], [0], [1], [0, 0, 1, 1], [], []>} : vector<2x32xf32>, vector<32x96xf32>, vector<2x96xf32> -> vector<2x96xf32>
    %129 = arith.addf %128, %33 : vector<2x96xf32>
    %130 = vector.extract_strided_slice %127 {offsets = [0, 0], sizes = [2, 64], strides = [1, 1]} : vector<2x96xf32> to vector<2x64xf32>
    %131 = vector.extract_strided_slice %129 {offsets = [0, 0], sizes = [2, 64], strides = [1, 1]} : vector<2x96xf32> to vector<2x64xf32>
    %132 = arith.addf %130, %131 : vector<2x64xf32>
    %133 = arith.negf %132 : vector<2x64xf32>
    %134 = math.exp %133 : vector<2x64xf32>
    %cst_37 = arith.constant 1.000000e+00 : f32
    %135 = vector.broadcast %cst_37 : f32 to vector<2x64xf32>
    %136 = arith.addf %135, %134 : vector<2x64xf32>
    %137 = arith.divf %135, %136 : vector<2x64xf32>
    %138 = vector.extract_strided_slice %137 {offsets = [0, 0], sizes = [2, 32], strides = [1, 1]} : vector<2x64xf32> to vector<2x32xf32>
    %139 = vector.extract_strided_slice %137 {offsets = [0, 32], sizes = [2, 32], strides = [1, 1]} : vector<2x64xf32> to vector<2x32xf32>
    %140 = vector.extract_strided_slice %127 {offsets = [0, 64], sizes = [2, 32], strides = [1, 1]} : vector<2x96xf32> to vector<2x32xf32>
    %141 = vector.extract_strided_slice %129 {offsets = [0, 64], sizes = [2, 32], strides = [1, 1]} : vector<2x96xf32> to vector<2x32xf32>
    %142 = arith.mulf %138, %141 : vector<2x32xf32>
    %143 = arith.addf %140, %142 : vector<2x32xf32>
    %144 = math.tanh %143 : vector<2x32xf32>
    %cst_38 = arith.constant 1.000000e+00 : f32
    %145 = vector.broadcast %cst_38 : f32 to vector<2x32xf32>
    %146 = arith.subf %145, %139 : vector<2x32xf32>
    %147 = arith.mulf %146, %144 : vector<2x32xf32>
    %148 = arith.mulf %139, %126 : vector<2x32xf32>
    %149 = arith.addf %147, %148 : vector<2x32xf32>
    %150 = vector.extract_strided_slice %31 {offsets = [10, 0], sizes = [2, 96], strides = [1, 1]} : vector<16x96xf32> to vector<2x96xf32>
    %cst_39 = arith.constant dense<0.000000e+00> : vector<2x96xf32>
    %151 = tpu.matmul %149, %3, %cst_39 {dimension_numbers = #tpu.dot_dimension_numbers<[1], [0], [0], [1], [0, 0, 1, 1], [], []>} : vector<2x32xf32>, vector<32x96xf32>, vector<2x96xf32> -> vector<2x96xf32>
    %152 = arith.addf %151, %33 : vector<2x96xf32>
    %153 = vector.extract_strided_slice %150 {offsets = [0, 0], sizes = [2, 64], strides = [1, 1]} : vector<2x96xf32> to vector<2x64xf32>
    %154 = vector.extract_strided_slice %152 {offsets = [0, 0], sizes = [2, 64], strides = [1, 1]} : vector<2x96xf32> to vector<2x64xf32>
    %155 = arith.addf %153, %154 : vector<2x64xf32>
    %156 = arith.negf %155 : vector<2x64xf32>
    %157 = math.exp %156 : vector<2x64xf32>
    %cst_40 = arith.constant 1.000000e+00 : f32
    %158 = vector.broadcast %cst_40 : f32 to vector<2x64xf32>
    %159 = arith.addf %158, %157 : vector<2x64xf32>
    %160 = arith.divf %158, %159 : vector<2x64xf32>
    %161 = vector.extract_strided_slice %160 {offsets = [0, 0], sizes = [2, 32], strides = [1, 1]} : vector<2x64xf32> to vector<2x32xf32>
    %162 = vector.extract_strided_slice %160 {offsets = [0, 32], sizes = [2, 32], strides = [1, 1]} : vector<2x64xf32> to vector<2x32xf32>
    %163 = vector.extract_strided_slice %150 {offsets = [0, 64], sizes = [2, 32], strides = [1, 1]} : vector<2x96xf32> to vector<2x32xf32>
    %164 = vector.extract_strided_slice %152 {offsets = [0, 64], sizes = [2, 32], strides = [1, 1]} : vector<2x96xf32> to vector<2x32xf32>
    %165 = arith.mulf %161, %164 : vector<2x32xf32>
    %166 = arith.addf %163, %165 : vector<2x32xf32>
    %167 = math.tanh %166 : vector<2x32xf32>
    %cst_41 = arith.constant 1.000000e+00 : f32
    %168 = vector.broadcast %cst_41 : f32 to vector<2x32xf32>
    %169 = arith.subf %168, %162 : vector<2x32xf32>
    %170 = arith.mulf %169, %167 : vector<2x32xf32>
    %171 = arith.mulf %162, %149 : vector<2x32xf32>
    %172 = arith.addf %170, %171 : vector<2x32xf32>
    %173 = vector.extract_strided_slice %31 {offsets = [12, 0], sizes = [2, 96], strides = [1, 1]} : vector<16x96xf32> to vector<2x96xf32>
    %cst_42 = arith.constant dense<0.000000e+00> : vector<2x96xf32>
    %174 = tpu.matmul %172, %3, %cst_42 {dimension_numbers = #tpu.dot_dimension_numbers<[1], [0], [0], [1], [0, 0, 1, 1], [], []>} : vector<2x32xf32>, vector<32x96xf32>, vector<2x96xf32> -> vector<2x96xf32>
    %175 = arith.addf %174, %33 : vector<2x96xf32>
    %176 = vector.extract_strided_slice %173 {offsets = [0, 0], sizes = [2, 64], strides = [1, 1]} : vector<2x96xf32> to vector<2x64xf32>
    %177 = vector.extract_strided_slice %175 {offsets = [0, 0], sizes = [2, 64], strides = [1, 1]} : vector<2x96xf32> to vector<2x64xf32>
    %178 = arith.addf %176, %177 : vector<2x64xf32>
    %179 = arith.negf %178 : vector<2x64xf32>
    %180 = math.exp %179 : vector<2x64xf32>
    %cst_43 = arith.constant 1.000000e+00 : f32
    %181 = vector.broadcast %cst_43 : f32 to vector<2x64xf32>
    %182 = arith.addf %181, %180 : vector<2x64xf32>
    %183 = arith.divf %181, %182 : vector<2x64xf32>
    %184 = vector.extract_strided_slice %183 {offsets = [0, 0], sizes = [2, 32], strides = [1, 1]} : vector<2x64xf32> to vector<2x32xf32>
    %185 = vector.extract_strided_slice %183 {offsets = [0, 32], sizes = [2, 32], strides = [1, 1]} : vector<2x64xf32> to vector<2x32xf32>
    %186 = vector.extract_strided_slice %173 {offsets = [0, 64], sizes = [2, 32], strides = [1, 1]} : vector<2x96xf32> to vector<2x32xf32>
    %187 = vector.extract_strided_slice %175 {offsets = [0, 64], sizes = [2, 32], strides = [1, 1]} : vector<2x96xf32> to vector<2x32xf32>
    %188 = arith.mulf %184, %187 : vector<2x32xf32>
    %189 = arith.addf %186, %188 : vector<2x32xf32>
    %190 = math.tanh %189 : vector<2x32xf32>
    %cst_44 = arith.constant 1.000000e+00 : f32
    %191 = vector.broadcast %cst_44 : f32 to vector<2x32xf32>
    %192 = arith.subf %191, %185 : vector<2x32xf32>
    %193 = arith.mulf %192, %190 : vector<2x32xf32>
    %194 = arith.mulf %185, %172 : vector<2x32xf32>
    %195 = arith.addf %193, %194 : vector<2x32xf32>
    %196 = vector.extract_strided_slice %31 {offsets = [14, 0], sizes = [2, 96], strides = [1, 1]} : vector<16x96xf32> to vector<2x96xf32>
    %cst_45 = arith.constant dense<0.000000e+00> : vector<2x96xf32>
    %197 = tpu.matmul %195, %3, %cst_45 {dimension_numbers = #tpu.dot_dimension_numbers<[1], [0], [0], [1], [0, 0, 1, 1], [], []>} : vector<2x32xf32>, vector<32x96xf32>, vector<2x96xf32> -> vector<2x96xf32>
    %198 = arith.addf %197, %33 : vector<2x96xf32>
    %199 = vector.extract_strided_slice %196 {offsets = [0, 0], sizes = [2, 64], strides = [1, 1]} : vector<2x96xf32> to vector<2x64xf32>
    %200 = vector.extract_strided_slice %198 {offsets = [0, 0], sizes = [2, 64], strides = [1, 1]} : vector<2x96xf32> to vector<2x64xf32>
    %201 = arith.addf %199, %200 : vector<2x64xf32>
    %202 = arith.negf %201 : vector<2x64xf32>
    %203 = math.exp %202 : vector<2x64xf32>
    %cst_46 = arith.constant 1.000000e+00 : f32
    %204 = vector.broadcast %cst_46 : f32 to vector<2x64xf32>
    %205 = arith.addf %204, %203 : vector<2x64xf32>
    %206 = arith.divf %204, %205 : vector<2x64xf32>
    %207 = vector.extract_strided_slice %206 {offsets = [0, 0], sizes = [2, 32], strides = [1, 1]} : vector<2x64xf32> to vector<2x32xf32>
    %208 = vector.extract_strided_slice %206 {offsets = [0, 32], sizes = [2, 32], strides = [1, 1]} : vector<2x64xf32> to vector<2x32xf32>
    %209 = vector.extract_strided_slice %196 {offsets = [0, 64], sizes = [2, 32], strides = [1, 1]} : vector<2x96xf32> to vector<2x32xf32>
    %210 = vector.extract_strided_slice %198 {offsets = [0, 64], sizes = [2, 32], strides = [1, 1]} : vector<2x96xf32> to vector<2x32xf32>
    %211 = arith.mulf %207, %210 : vector<2x32xf32>
    %212 = arith.addf %209, %211 : vector<2x32xf32>
    %213 = math.tanh %212 : vector<2x32xf32>
    %cst_47 = arith.constant 1.000000e+00 : f32
    %214 = vector.broadcast %cst_47 : f32 to vector<2x32xf32>
    %215 = arith.subf %214, %208 : vector<2x32xf32>
    %216 = arith.mulf %215, %213 : vector<2x32xf32>
    %217 = arith.mulf %208, %195 : vector<2x32xf32>
    %218 = arith.addf %216, %217 : vector<2x32xf32>
    %cst_48 = arith.constant dense<0.000000e+00> : vector<2x40xf32>
    %219 = tpu.matmul %218, %6, %cst_48 {dimension_numbers = #tpu.dot_dimension_numbers<[1], [0], [0], [1], [0, 0, 1, 1], [], []>} : vector<2x32xf32>, vector<32x40xf32>, vector<2x40xf32> -> vector<2x40xf32>
    %220 = arith.addf %27, %219 : vector<2x40xf32>
    %221 = vector.extract_strided_slice %220 {offsets = [0, 0], sizes = [2, 8], strides = [1, 1]} : vector<2x40xf32> to vector<2x8xf32>
    %222 = vector.extract_strided_slice %220 {offsets = [0, 8], sizes = [2, 32], strides = [1, 1]} : vector<2x40xf32> to vector<2x32xf32>
    %cst_49 = arith.constant dense<0xFF800000> : vector<2xf32>
    %223 = vector.multi_reduction <maximumf>, %221, %cst_49 [1] : vector<2x8xf32> to vector<2xf32>
    %224 = vector.shape_cast %223 : vector<2xf32> to vector<2x1xf32>
    %225 = vector.broadcast %224 : vector<2x1xf32> to vector<2x8xf32>
    %226 = arith.subf %221, %225 : vector<2x8xf32>
    %227 = math.exp %226 : vector<2x8xf32>
    %cst_50 = arith.constant dense<0.000000e+00> : vector<2xf32>
    %228 = vector.multi_reduction <add>, %227, %cst_50 [1] : vector<2x8xf32> to vector<2xf32>
    %229 = vector.shape_cast %228 : vector<2xf32> to vector<2x1xf32>
    %230 = math.log %229 : vector<2x1xf32>
    %231 = vector.broadcast %230 : vector<2x1xf32> to vector<2x8xf32>
    %232 = arith.subf %226, %231 : vector<2x8xf32>
    %233 = tpu.concatenate %232, %222 in 1 : vector<2x8xf32>, vector<2x32xf32> -> vector<2x40xf32>
    %c0_51 = arith.constant 0 : index
    %c0_52 = arith.constant 0 : index
    %234 = vector.load %arg4[%c0_51, %c0_52] : memref<2x40xf32, #tpu.memory_space<vmem>>, vector<2x40xf32>
    tpu.vector_store %arg4[%c0_51, %c0_52], %233 {strides = array<i32>} : memref<2x40xf32, #tpu.memory_space<vmem>>, vector<2x40xf32>,
    return
  }
}

</mosaic_0001>

<llo_original>
// kernel: aux_emotion_net_forward.1
$region0: #{aux_emotion_net_forward.1}
  #allocation0 [shape = 'u32[]', space=smem, size = 0x4, offset = 0x4, fixed_abs, tag = 'smem constant byte address 0x4 - core index']
  #allocation1 [shape = 'u32[144,128]{1,0:T(1,128)}', space=vmem, size = 0x12000, scoped, tag = 'internal scratch']
  %s0 = inlined_call_operand.vmem [shape: f32[2,64], index: 0, kind: input, shape index: {}]
  %s1 = inlined_call_operand.vmem [shape: f32[2,16], index: 1, kind: input, shape index: {}]
  %s2 = inlined_call_operand.vmem [shape: f32[16,32], index: 2, kind: input, shape index: {}]
  %s3 = inlined_call_operand.hbm [shape: f32[280,128], index: 3, kind: input, shape index: {}]
  %s4 = inlined_call_operand.vmem [shape: f32[2,40], index: 4, kind: output, shape index: {}]
  %s5 = sld [smem:[#allocation0]]
  $region30: #{aux_emotion_net_forward.1} parent=0
    _
  %s7 = ssub.s32 1, %s5
  %s8 = scalar_select 0, %s7, %s5
  $region1: #{aux_emotion_net_forward.1} parent=0
    #allocation2 [shape = 'u8[143360]{0}', space=vmem, size = 0x23000, scoped, tag = 'input window, operand 3, single buffered']
    #allocation3 [shape = 's32[1]{0}', space=sflag, size = 0x4, scoped, tag = 'scoped memory for aux_emotion_net_forward.1']
    %9 = vsyncpa [#allocation3], 0
    // Predicated region
    $region2: #{aux_emotion_net_forward.1} parent=1 // pred_check
      _
    $region3: #{aux_emotion_net_forward.1} parent=1 // pred_check_branch
      %11 = sbr.rel (0) target = $region5
    $region4: #{aux_emotion_net_forward.1} parent=1 // pred_region
      _
    $region5: #{aux_emotion_net_forward.1} parent=1 // pred_fallthru
      _
    // Predicated region
    $region6: #{aux_emotion_net_forward.1} parent=1 // pred_check
      _
    $region7: #{aux_emotion_net_forward.1} parent=1 // pred_check_branch
      %13 = sbr.rel (0) target = $region9
    $region8: #{aux_emotion_net_forward.1} parent=1 // pred_region
      _
    $region9: #{aux_emotion_net_forward.1} parent=1 // pred_fallthru
      _
    // Predicated region
    $region10: #{aux_emotion_net_forward.1} parent=1 // pred_check
      _
    $region11: #{aux_emotion_net_forward.1} parent=1 // pred_check_branch
      %15 = sbr.rel (0) target = $region13
    $region12: #{aux_emotion_net_forward.1} parent=1 // pred_region
      _
    $region13: #{aux_emotion_net_forward.1} parent=1 // pred_fallthru
      _
    // Predicated region
    $region14: #{aux_emotion_net_forward.1} parent=1 // pred_check
      _
    $region15: #{aux_emotion_net_forward.1} parent=1 // pred_check_branch
      %17 = sbr.rel (0) target = $region17
    $region16: #{aux_emotion_net_forward.1} parent=1 // pred_region
      %s19 = ssub.s32 4480, 4480
      %20 = vsyncadd [#allocation3], %s19
      %s21 = sshll.u32 [#allocation2], 4
      %s22 = int_to_ptr.vmem [resolvable:$true] %s21
      %27 = dma.hbm_to_vmem [thread:$0]  %s3, 4480, %s22, [#allocation3], 128, 128, 8
    $region17: #{aux_emotion_net_forward.1} parent=1 // pred_fallthru
      _
    // Predicated region
    $region18: #{aux_emotion_net_forward.1} parent=1 // pred_check
      _
    $region19: #{aux_emotion_net_forward.1} parent=1 // pred_check_branch
      %29 = sbr.rel (0) target = $region21
    $region20: #{aux_emotion_net_forward.1} parent=1 // pred_region
      %30 = dma.done [#allocation3], 4480
    $region21: #{aux_emotion_net_forward.1} parent=1 // pred_fallthru
      _
    %v31 = vld [vmem:[#allocation2] sm:$0xff]
    %v32 = vld [vmem:[#allocation2 + $0x8] sm:$0xff]
    %v33 = vld [vmem:[#allocation2 + $0x10] sm:$0xff]
    %v34 = vld [vmem:[#allocation2 + $0x18] sm:$0xff]
    %v35 = vld [vmem:[#allocation2 + $0x20] sm:$0xff]
    %v36 = vld [vmem:[#allocation2 + $0x28] sm:$0xff]
    %v37 = vld [vmem:[#allocation2 + $0x30] sm:$0xff]
    %v38 = vld [vmem:[#allocation2 + $0x38] sm:$0xff]
    %v39 = vld [vmem:[#allocation2 + $0x40] sm:$0xff]
    %v40 = vld [vmem:[#allocation2 + $0x48] sm:$0xff]
    %v41 = vld [vmem:[#allocation2 + $0x50] sm:$0xff]
    %v42 = vld [vmem:[#allocation2 + $0x58] sm:$0xff]
    %v43 = vld [vmem:[#allocation2 + $0x60] sm:$0xff]
    %v44 = vld [vmem:[#allocation2 + $0x68] sm:$0xff]
    %v45 = vld [vmem:[#allocation2 + $0x70] sm:$0xff]
    %v46 = vld [vmem:[#allocation2 + $0x78] sm:$0xff]
    %v47 = vld [vmem:[#allocation2 + $0x80] sm:$0xff]
    %v48 = vld [vmem:[#allocation2 + $0x88] sm:$0xff]
    %v49 = vld [vmem:[#allocation2 + $0x90] sm:$0xff]
    %v50 = vld [vmem:[#allocation2 + $0x98] sm:$0xff]
    %v51 = vld [vmem:[#allocation2 + $0xa0] sm:$0xff]
    %v52 = vld [vmem:[#allocation2 + $0xa8] sm:$0xff]
    %v53 = vld [vmem:[#allocation2 + $0xb0] sm:$0xff]
    %v54 = vld [vmem:[#allocation2 + $0xb8] sm:$0xff]
    %v55 = vld [vmem:[#allocation2 + $0xc0] sm:$0xff]
    %v56 = vld [vmem:[#allocation2 + $0xc8] sm:$0xff]
    %v57 = vld [vmem:[#allocation2 + $0xd0] sm:$0xff]
    %v58 = vld [vmem:[#allocation2 + $0xd8] sm:$0xff]
    %v59 = vld [vmem:[#allocation2 + $0xe0] sm:$0xff]
    %v60 = vld [vmem:[#allocation2 + $0xe8] sm:$0xff]
    %v61 = vld [vmem:[#allocation2 + $0xf0] sm:$0xff]
    %v62 = vld [vmem:[#allocation2 + $0xf8] sm:$0xff]
    %v63 = vld [vmem:[#allocation2 + $0x100] sm:$0xff]
    %v64 = vld [vmem:[#allocation2 + $0x108] sm:$0xff]
    %v65 = vld [vmem:[#allocation2 + $0x110] sm:$0x1]
    %v66 = vld [vmem:[#allocation2 + $0x111] sm:$0x1]
    %v67 = vld [vmem:[#allocation2 + $0x112] sm:$0x1]
    %v68 = vld [vmem:[#allocation2 + $0x113] sm:$0x1]
    %v69 = vld [vmem:[#allocation2 + $0x114] sm:$0x1]
    %v70 = vld [vmem:[%s0] sm:$0x3]
    %v71 = vlaneseq
    %v72 = vshrl.u32 %v71, 7
    %v73 = vsub.s32 0, %v72
    %v74 = vrot.slane %v65, %v73
    %vm75 = vcmask 523264
    %v77 = vsel %vm75, %v70, 0
    %79 = vmatprep.subr.mxu0 0.0
    %80 = vmatpush1.msra.mxu0 0.0
    %81 = vmatprep.subr.mxu0 0.0
    %82 = vmatpush1.msra.mxu0 0.0
    %83 = vmatprep.subr.mxu0 0.0
    %84 = vmatpush1.msra.mxu0 0.0
    %85 = vmatprep.subr.mxu0 0.0
    %86 = vmatpush1.msra.mxu0 0.0
    %87 = vmatprep.subr.mxu0 0.0
    %88 = vmatpush1.msra.mxu0 0.0
    %89 = vmatprep.subr.mxu0 0.0
    %90 = vmatpush1.msra.mxu0 0.0
    %91 = vmatprep.subr.mxu0 0.0
    %92 = vmatpush1.msra.mxu0 0.0
    %93 = vmatprep.subr.mxu0 0.0
    %94 = vmatpush1.msra.mxu0 0.0
    %95 = vmatprep.subr.mxu0 0.0
    %96 = vmatpush1.msra.mxu0 %v38
    %97 = vmatprep.subr.mxu0 0.0
    %98 = vmatpush1.msra.mxu0 %v37
    %99 = vmatprep.subr.mxu0 0.0
    %100 = vmatpush1.msra.mxu0 %v36
    %101 = vmatprep.subr.mxu0 0.0
    %102 = vmatpush1.msra.mxu0 %v35
    %103 = vmatprep.subr.mxu0 0.0
    %104 = vmatpush1.msra.mxu0 %v34
    %105 = vmatprep.subr.mxu0 0.0
    %106 = vmatpush1.msra.mxu0 %v33
    %107 = vmatprep.subr.mxu0 0.0
    %108 = vmatpush1.msra.mxu0 %v32
    %109 = vmatprep.subr.mxu0 0.0
    %110 = vmatpush1.msra.mxu0 %v31
    %111 = vmatprep.subr.mxu0 0.0
    %112 = vmatpush2.msra.mxu0 0.0
    %113 = vmatprep.subr.mxu0 0.0
    %114 = vmatpush2.msra.mxu0 0.0
    %115 = vmatprep.subr.mxu0 0.0
    %116 = vmatpush2.msra.mxu0 0.0
    %117 = vmatprep.subr.mxu0 0.0
    %118 = vmatpush2.msra.mxu0 0.0
    %119 = vmatprep.subr.mxu0 0.0
    %120 = vmatpush2.msra.mxu0 0.0
    %121 = vmatprep.subr.mxu0 0.0
    %122 = vmatpush2.msra.mxu0 0.0
    %123 = vmatprep.subr.mxu0 0.0
    %124 = vmatpush2.msra.mxu0 0.0
    %125 = vmatprep.subr.mxu0 0.0
    %126 = vmatpush2.msra.mxu0 0.0
    %127 = vmatprep.subr.mxu0 0.0
    %128 = vmatpush2.msra.mxu0 0.0
    %129 = vmatprep.subr.mxu0 0.0
    %130 = vmatpush2.msra.mxu0 0.0
    %131 = vmatprep.subr.mxu0 0.0
    %132 = vmatpush2.msra.mxu0 0.0
    %133 = vmatprep.subr.mxu0 0.0
    %134 = vmatpush2.msra.mxu0 0.0
    %135 = vmatprep.subr.mxu0 0.0
    %136 = vmatpush2.msra.mxu0 0.0
    %137 = vmatprep.subr.mxu0 0.0
    %138 = vmatpush2.msra.mxu0 0.0
    %139 = vmatprep.subr.mxu0 0.0
    %140 = vmatpush2.msra.mxu0 0.0
    %141 = vmatprep.subr.mxu0 0.0
    %142 = vmatpush2.msra.mxu0 0.0
    %143 = vmatprep.mubr.f32.mxu0 0.0
    %144 = vmatmul.mubr.f32.gmra.mxu0 %v77
    %v145 = vpop.f32.mrf.mxu0
    %v146 = vadd.f32 %v74, %v145
    %v147 = vpop.f32.mrf.mxu0
    %148 = vdwg.mxu0
    %v149 = vmul.f32 %v146, 0.05
    %v150 = vmax.f32 %v146, %v149
    %v151 = vlaneseq
    %v152 = vshrl.u32 %v151, 7
    %v153 = vsub.s32 0, %v152
    %v154 = vrot.slane %v66, %v153
    %vm155 = vcmask 261120
    %v157 = vsel %vm155, %v150, 0
    %159 = vmatprep.subr.mxu0 0.0
    %160 = vmatpush1.msra.mxu0 0.0
    %161 = vmatprep.subr.mxu0 0.0
    %162 = vmatpush1.msra.mxu0 0.0
    %163 = vmatprep.subr.mxu0 0.0
    %164 = vmatpush1.msra.mxu0 0.0
    %165 = vmatprep.subr.mxu0 0.0
    %166 = vmatpush1.msra.mxu0 0.0
    %167 = vmatprep.subr.mxu0 0.0
    %168 = vmatpush1.msra.mxu0 0.0
    %169 = vmatprep.subr.mxu0 0.0
    %170 = vmatpush1.msra.mxu0 0.0
    %171 = vmatprep.subr.mxu0 0.0
    %172 = vmatpush1.msra.mxu0 0.0
    %173 = vmatprep.subr.mxu0 0.0
    %174 = vmatpush1.msra.mxu0 0.0
    %175 = vmatprep.subr.mxu0 0.0
    %176 = vmatpush1.msra.mxu0 0.0
    %177 = vmatprep.subr.mxu0 0.0
    %178 = vmatpush1.msra.mxu0 0.0
    %179 = vmatprep.subr.mxu0 0.0
    %180 = vmatpush1.msra.mxu0 0.0
    %181 = vmatprep.subr.mxu0 0.0
    %182 = vmatpush1.msra.mxu0 0.0
    %183 = vmatprep.subr.mxu0 0.0
    %184 = vmatpush1.msra.mxu0 %v42
    %185 = vmatprep.subr.mxu0 0.0
    %186 = vmatpush1.msra.mxu0 %v41
    %187 = vmatprep.subr.mxu0 0.0
    %188 = vmatpush1.msra.mxu0 %v40
    %189 = vmatprep.subr.mxu0 0.0
    %190 = vmatpush1.msra.mxu0 %v39
    %191 = vmatprep.subr.mxu0 0.0
    %192 = vmatpush2.msra.mxu0 0.0
    %193 = vmatprep.subr.mxu0 0.0
    %194 = vmatpush2.msra.mxu0 0.0
    %195 = vmatprep.subr.mxu0 0.0
    %196 = vmatpush2.msra.mxu0 0.0
    %197 = vmatprep.subr.mxu0 0.0
    %198 = vmatpush2.msra.mxu0 0.0
    %199 = vmatprep.subr.mxu0 0.0
    %200 = vmatpush2.msra.mxu0 0.0
    %201 = vmatprep.subr.mxu0 0.0
    %202 = vmatpush2.msra.mxu0 0.0
    %203 = vmatprep.subr.mxu0 0.0
    %204 = vmatpush2.msra.mxu0 0.0
    %205 = vmatprep.subr.mxu0 0.0
    %206 = vmatpush2.msra.mxu0 0.0
    %207 = vmatprep.subr.mxu0 0.0
    %208 = vmatpush2.msra.mxu0 0.0
    %209 = vmatprep.subr.mxu0 0.0
    %210 = vmatpush2.msra.mxu0 0.0
    %211 = vmatprep.subr.mxu0 0.0
    %212 = vmatpush2.msra.mxu0 0.0
    %213 = vmatprep.subr.mxu0 0.0
    %214 = vmatpush2.msra.mxu0 0.0
    %215 = vmatprep.subr.mxu0 0.0
    %216 = vmatpush2.msra.mxu0 0.0
    %217 = vmatprep.subr.mxu0 0.0
    %218 = vmatpush2.msra.mxu0 0.0
    %219 = vmatprep.subr.mxu0 0.0
    %220 = vmatpush2.msra.mxu0 0.0
    %221 = vmatprep.subr.mxu0 0.0
    %222 = vmatpush2.msra.mxu0 0.0
    %223 = vmatprep.mubr.f32.mxu0 0.0
    %224 = vmatmul.mubr.f32.gmra.mxu0 %v157
    %v225 = vpop.f32.mrf.mxu0
    %v226 = vadd.f32 %v154, %v225
    %v227 = vpop.f32.mrf.mxu0
    %228 = vdwg.mxu0
    %v229 = vld [vmem:[%s1] sm:$0x3]
    %vm230 = vcmask 130048
    %v232 = vsel %vm230, %v229, 0
    %234 = vmatprep.subr.mxu0 0.0
    %235 = vmatpush1.msra.mxu0 0.0
    %236 = vmatprep.subr.mxu0 0.0
    %237 = vmatpush1.msra.mxu0 0.0
    %238 = vmatprep.subr.mxu0 0.0
    %239 = vmatpush1.msra.mxu0 0.0
    %240 = vmatprep.subr.mxu0 0.0
    %241 = vmatpush1.msra.mxu0 0.0
    %242 = vmatprep.subr.mxu0 0.0
    %243 = vmatpush1.msra.mxu0 0.0
    %244 = vmatprep.subr.mxu0 0.0
    %245 = vmatpush1.msra.mxu0 0.0
    %246 = vmatprep.subr.mxu0 0.0
    %247 = vmatpush1.msra.mxu0 0.0
    %248 = vmatprep.subr.mxu0 0.0
    %249 = vmatpush1.msra.mxu0 0.0
    %250 = vmatprep.subr.mxu0 0.0
    %251 = vmatpush1.msra.mxu0 0.0
    %252 = vmatprep.subr.mxu0 0.0
    %253 = vmatpush1.msra.mxu0 0.0
    %254 = vmatprep.subr.mxu0 0.0
    %255 = vmatpush1.msra.mxu0 0.0
    %256 = vmatprep.subr.mxu0 0.0
    %257 = vmatpush1.msra.mxu0 0.0
    %258 = vmatprep.subr.mxu0 0.0
    %259 = vmatpush1.msra.mxu0 0.0
    %260 = vmatprep.subr.mxu0 0.0
    %261 = vmatpush1.msra.mxu0 0.0
    %262 = vmatprep.subr.mxu0 0.0
    %263 = vmatpush1.msra.mxu0 %v60
    %264 = vmatprep.subr.mxu0 0.0
    %265 = vmatpush1.msra.mxu0 %v59
    %266 = vmatprep.subr.mxu0 0.0
    %267 = vmatpush2.msra.mxu0 0.0
    %268 = vmatprep.subr.mxu0 0.0
    %269 = vmatpush2.msra.mxu0 0.0
    %270 = vmatprep.subr.mxu0 0.0
    %271 = vmatpush2.msra.mxu0 0.0
    %272 = vmatprep.subr.mxu0 0.0
    %273 = vmatpush2.msra.mxu0 0.0
    %274 = vmatprep.subr.mxu0 0.0
    %275 = vmatpush2.msra.mxu0 0.0
    %276 = vmatprep.subr.mxu0 0.0
    %277 = vmatpush2.msra.mxu0 0.0
    %278 = vmatprep.subr.mxu0 0.0
    %279 = vmatpush2.msra.mxu0 0.0
    %280 = vmatprep.subr.mxu0 0.0
    %281 = vmatpush2.msra.mxu0 0.0
    %282 = vmatprep.subr.mxu0 0.0
    %283 = vmatpush2.msra.mxu0 0.0
    %284 = vmatprep.subr.mxu0 0.0
    %285 = vmatpush2.msra.mxu0 0.0
    %286 = vmatprep.subr.mxu0 0.0
    %287 = vmatpush2.msra.mxu0 0.0
    %288 = vmatprep.subr.mxu0 0.0
    %289 = vmatpush2.msra.mxu0 0.0
    %290 = vmatprep.subr.mxu0 0.0
    %291 = vmatpush2.msra.mxu0 0.0
    %292 = vmatprep.subr.mxu0 0.0
    %293 = vmatpush2.msra.mxu0 0.0
    %294 = vmatprep.subr.mxu0 0.0
    %295 = vmatpush2.msra.mxu0 0.0
    %296 = vmatprep.subr.mxu0 0.0
    %297 = vmatpush2.msra.mxu0 0.0
    %298 = vmatprep.mubr.f32.mxu0 0.0
    %299 = vmatmul.mubr.f32.gmra.mxu0 %v232
    %v300 = vpop.f32.mrf.mxu0
    %v301 = vadd.f32 0.0, %v300
    %v302 = vpop.f32.mrf.mxu0
    %303 = vdwg.mxu0
    %v305 = vsel %vm75, %v226, 0
    %307 = vmatprep.subr.mxu0 0.0
    %308 = vmatpush1.msra.mxu0 0.0
    %309 = vmatprep.subr.mxu0 0.0
    %310 = vmatpush1.msra.mxu0 0.0
    %311 = vmatprep.subr.mxu0 0.0
    %312 = vmatpush1.msra.mxu0 0.0
    %313 = vmatprep.subr.mxu0 0.0
    %314 = vmatpush1.msra.mxu0 0.0
    %315 = vmatprep.subr.mxu0 0.0
    %316 = vmatpush1.msra.mxu0 0.0
    %317 = vmatprep.subr.mxu0 0.0
    %318 = vmatpush1.msra.mxu0 0.0
    %319 = vmatprep.subr.mxu0 0.0
    %320 = vmatpush1.msra.mxu0 0.0
    %321 = vmatprep.subr.mxu0 0.0
    %322 = vmatpush1.msra.mxu0 0.0
    %323 = vmatprep.subr.mxu0 0.0
    %324 = vmatpush1.msra.mxu0 %v58
    %325 = vmatprep.subr.mxu0 0.0
    %326 = vmatpush1.msra.mxu0 %v57
    %327 = vmatprep.subr.mxu0 0.0
    %328 = vmatpush1.msra.mxu0 %v56
    %329 = vmatprep.subr.mxu0 0.0
    %330 = vmatpush1.msra.mxu0 %v55
    %331 = vmatprep.subr.mxu0 0.0
    %332 = vmatpush1.msra.mxu0 %v54
    %333 = vmatprep.subr.mxu0 0.0
    %334 = vmatpush1.msra.mxu0 %v53
    %335 = vmatprep.subr.mxu0 0.0
    %336 = vmatpush1.msra.mxu0 %v52
    %337 = vmatprep.subr.mxu0 0.0
    %338 = vmatpush1.msra.mxu0 %v51
    %339 = vmatprep.subr.mxu0 0.0
    %340 = vmatpush2.msra.mxu0 0.0
    %341 = vmatprep.subr.mxu0 0.0
    %342 = vmatpush2.msra.mxu0 0.0
    %343 = vmatprep.subr.mxu0 0.0
    %344 = vmatpush2.msra.mxu0 0.0
    %345 = vmatprep.subr.mxu0 0.0
    %346 = vmatpush2.msra.mxu0 0.0
    %347 = vmatprep.subr.mxu0 0.0
    %348 = vmatpush2.msra.mxu0 0.0
    %349 = vmatprep.subr.mxu0 0.0
    %350 = vmatpush2.msra.mxu0 0.0
    %351 = vmatprep.subr.mxu0 0.0
    %352 = vmatpush2.msra.mxu0 0.0
    %353 = vmatprep.subr.mxu0 0.0
    %354 = vmatpush2.msra.mxu0 0.0
    %355 = vmatprep.subr.mxu0 0.0
    %356 = vmatpush2.msra.mxu0 0.0
    %357 = vmatprep.subr.mxu0 0.0
    %358 = vmatpush2.msra.mxu0 0.0
    %359 = vmatprep.subr.mxu0 0.0
    %360 = vmatpush2.msra.mxu0 0.0
    %361 = vmatprep.subr.mxu0 0.0
    %362 = vmatpush2.msra.mxu0 0.0
    %363 = vmatprep.subr.mxu0 0.0
    %364 = vmatpush2.msra.mxu0 0.0
    %365 = vmatprep.subr.mxu0 0.0
    %366 = vmatpush2.msra.mxu0 0.0
    %367 = vmatprep.subr.mxu0 0.0
    %368 = vmatpush2.msra.mxu0 0.0
    %369 = vmatprep.subr.mxu0 0.0
    %370 = vmatpush2.msra.mxu0 0.0
    %371 = vmatprep.mubr.f32.mxu0 0.0
    %372 = vmatmul.mubr.f32.gmra.mxu0 %v305
    %v373 = vpop.f32.mrf.mxu0
    %v374 = vadd.f32 %v301, %v373
    %v375 = vpop.f32.mrf.mxu0
    %376 = vdwg.mxu0
    %v377 = vlaneseq
    %v378 = vshrl.u32 %v377, 7
    %v379 = vsub.s32 0, %v378
    %v380 = vrot.slane %v69, %v379
    %v381 = vadd.f32 %v374, %v380
    %v382 = vld [vmem:[%s2] sm:$0xff]
    %v383 = vld [vmem:[%s2 + $0x8] sm:$0xff]
    %v384 = vlaneseq
    %v385 = vshrl.u32 %v384, 7
    %v386 = vsub.s32 0, %v385
    %v387 = vrot.slane %v67, %v386
    %v389 = vsel %vm155, %v382, 0
    %v392 = vsel %vm155, %v383, 0
    %394 = vmatprep.subr.mxu0 0.0
    %395 = vmatpush1.msra.mxu0 0.0
    %396 = vmatprep.subr.mxu0 0.0
    %397 = vmatpush1.msra.mxu0 0.0
    %398 = vmatprep.subr.mxu0 0.0
    %399 = vmatpush1.msra.mxu0 0.0
    %400 = vmatprep.subr.mxu0 0.0
    %401 = vmatpush1.msra.mxu0 0.0
    %402 = vmatprep.subr.mxu0 0.0
    %403 = vmatpush1.msra.mxu0 0.0
    %404 = vmatprep.subr.mxu0 0.0
    %405 = vmatpush1.msra.mxu0 0.0
    %406 = vmatprep.subr.mxu0 0.0
    %407 = vmatpush1.msra.mxu0 0.0
    %408 = vmatprep.subr.mxu0 0.0
    %409 = vmatpush1.msra.mxu0 0.0
    %410 = vmatprep.subr.mxu0 0.0
    %411 = vmatpush1.msra.mxu0 0.0
    %412 = vmatprep.subr.mxu0 0.0
    %413 = vmatpush1.msra.mxu0 0.0
    %414 = vmatprep.subr.mxu0 0.0
    %415 = vmatpush1.msra.mxu0 0.0
    %416 = vmatprep.subr.mxu0 0.0
    %417 = vmatpush1.msra.mxu0 0.0
    %418 = vmatprep.subr.mxu0 0.0
    %419 = vmatpush1.msra.mxu0 %v46
    %420 = vmatprep.subr.mxu0 0.0
    %421 = vmatpush1.msra.mxu0 %v45
    %422 = vmatprep.subr.mxu0 0.0
    %423 = vmatpush1.msra.mxu0 %v44
    %424 = vmatprep.subr.mxu0 0.0
    %425 = vmatpush1.msra.mxu0 %v43
    %426 = vmatprep.subr.mxu0 0.0
    %427 = vmatpush2.msra.mxu0 0.0
    %428 = vmatprep.subr.mxu0 0.0
    %429 = vmatpush2.msra.mxu0 0.0
    %430 = vmatprep.subr.mxu0 0.0
    %431 = vmatpush2.msra.mxu0 0.0
    %432 = vmatprep.subr.mxu0 0.0
    %433 = vmatpush2.msra.mxu0 0.0
    %434 = vmatprep.subr.mxu0 0.0
    %435 = vmatpush2.msra.mxu0 0.0
    %436 = vmatprep.subr.mxu0 0.0
    %437 = vmatpush2.msra.mxu0 0.0
    %438 = vmatprep.subr.mxu0 0.0
    %439 = vmatpush2.msra.mxu0 0.0
    %440 = vmatprep.subr.mxu0 0.0
    %441 = vmatpush2.msra.mxu0 0.0
    %442 = vmatprep.subr.mxu0 0.0
    %443 = vmatpush2.msra.mxu0 0.0
    %444 = vmatprep.subr.mxu0 0.0
    %445 = vmatpush2.msra.mxu0 0.0
    %446 = vmatprep.subr.mxu0 0.0
    %447 = vmatpush2.msra.mxu0 0.0
    %448 = vmatprep.subr.mxu0 0.0
    %449 = vmatpush2.msra.mxu0 0.0
    %450 = vmatprep.subr.mxu0 0.0
    %451 = vmatpush2.msra.mxu0 0.0
    %452 = vmatprep.subr.mxu0 0.0
    %453 = vmatpush2.msra.mxu0 0.0
    %454 = vmatprep.subr.mxu0 0.0
    %455 = vmatpush2.msra.mxu0 0.0
    %456 = vmatprep.subr.mxu0 0.0
    %457 = vmatpush2.msra.mxu0 0.0
    %458 = vmatprep.mubr.f32.mxu0 0.0
    %459 = vmatmul.mubr.f32.gmra.mxu0 %v389
    %v460 = vpop.f32.mrf.mxu0
    %v461 = vadd.f32 %v387, %v460
    %v462 = vpop.f32.mrf.mxu0
    %463 = vmatprep.mubr.f32.mxu0 0.0
    %464 = vmatmul.mubr.f32.gmra.mxu0 %v392
    %v465 = vpop.f32.mrf.mxu0
    %v466 = vadd.f32 %v387, %v465
    %v467 = vpop.f32.mrf.mxu0
    %468 = vdwg.mxu0
    %v469 = vlaneseq
    %v470 = vshrl.u32 %v469, 7
    %v471 = vsub.s32 0, %v470
    %v472 = vrot.slane %v68, %v471
    %v474 = vsel %vm155, 0.0, 0
    %476 = vmatprep.subr.mxu0 0.0
    %477 = vmatpush1.msra.mxu0 0.0
    %478 = vmatprep.subr.mxu0 0.0
    %479 = vmatpush1.msra.mxu0 0.0
    %480 = vmatprep.subr.mxu0 0.0
    %481 = vmatpush1.msra.mxu0 0.0
    %482 = vmatprep.subr.mxu0 0.0
    %483 = vmatpush1.msra.mxu0 0.0
    %484 = vmatprep.subr.mxu0 0.0
    %485 = vmatpush1.msra.mxu0 0.0
    %486 = vmatprep.subr.mxu0 0.0
    %487 = vmatpush1.msra.mxu0 0.0
    %488 = vmatprep.subr.mxu0 0.0
    %489 = vmatpush1.msra.mxu0 0.0
    %490 = vmatprep.subr.mxu0 0.0
    %491 = vmatpush1.msra.mxu0 0.0
    %492 = vmatprep.subr.mxu0 0.0
    %493 = vmatpush1.msra.mxu0 0.0
    %494 = vmatprep.subr.mxu0 0.0
    %495 = vmatpush1.msra.mxu0 0.0
    %496 = vmatprep.subr.mxu0 0.0
    %497 = vmatpush1.msra.mxu0 0.0
    %498 = vmatprep.subr.mxu0 0.0
    %499 = vmatpush1.msra.mxu0 0.0
    %500 = vmatprep.subr.mxu0 0.0
    %501 = vmatpush1.msra.mxu0 %v50
    %502 = vmatprep.subr.mxu0 0.0
    %503 = vmatpush1.msra.mxu0 %v49
    %504 = vmatprep.subr.mxu0 0.0
    %505 = vmatpush1.msra.mxu0 %v48
    %506 = vmatprep.subr.mxu0 0.0
    %507 = vmatpush1.msra.mxu0 %v47
    %508 = vmatprep.subr.mxu0 0.0
    %509 = vmatpush2.msra.mxu0 0.0
    %510 = vmatprep.subr.mxu0 0.0
    %511 = vmatpush2.msra.mxu0 0.0
    %512 = vmatprep.subr.mxu0 0.0
    %513 = vmatpush2.msra.mxu0 0.0
    %514 = vmatprep.subr.mxu0 0.0
    %515 = vmatpush2.msra.mxu0 0.0
    %516 = vmatprep.subr.mxu0 0.0
    %517 = vmatpush2.msra.mxu0 0.0
    %518 = vmatprep.subr.mxu0 0.0
    %519 = vmatpush2.msra.mxu0 0.0
    %520 = vmatprep.subr.mxu0 0.0
    %521 = vmatpush2.msra.mxu0 0.0
    %522 = vmatprep.subr.mxu0 0.0
    %523 = vmatpush2.msra.mxu0 0.0
    %524 = vmatprep.subr.mxu0 0.0
    %525 = vmatpush2.msra.mxu0 0.0
    %526 = vmatprep.subr.mxu0 0.0
    %527 = vmatpush2.msra.mxu0 0.0
    %528 = vmatprep.subr.mxu0 0.0
    %529 = vmatpush2.msra.mxu0 0.0
    %530 = vmatprep.subr.mxu0 0.0
    %531 = vmatpush2.msra.mxu0 0.0
    %532 = vmatprep.subr.mxu0 0.0
    %533 = vmatpush2.msra.mxu0 0.0
    %534 = vmatprep.subr.mxu0 0.0
    %535 = vmatpush2.msra.mxu0 0.0
    %536 = vmatprep.subr.mxu0 0.0
    %537 = vmatpush2.msra.mxu0 0.0
    %538 = vmatprep.subr.mxu0 0.0
    %539 = vmatpush2.msra.mxu0 0.0
    %540 = vmatprep.mubr.f32.mxu0 0.0
    %541 = vmatmul.mubr.f32.gmra.mxu0 %v474
    %v542 = vpop.f32.mrf.mxu0
    %v543 = vadd.f32 %v472, %v542
    %v544 = vpop.f32.mrf.mxu0
    %545 = vdwg.mxu0
    %v546 = vadd.f32 %v461, %v543
    %v547 = vxor.u32 %v546, 2147483648
    %v548 = vmul.f32 %v547, 1.442695
    %v549 = vpow.pop %v548
    %v550 = vadd.f32 %v549, 1.0
    %v551 = vrcp.pop %v550
    %v552 = vmul.f32 1.0, %v551
    %554 = vrot.lane.b32.xlu0 %v543, 64
    %v555 = vpop.permute.xlu0 %554
    %v557 = vmul.f32 %v552, %v555
    %559 = vrot.lane.b32.xlu0 %v557, 64
    %v560 = vpop.permute.xlu0 %559
    %v562 = vadd.f32 %v461, %v560
    %v563 = vtanh.pop %v562
    %v564 = vsub.f32 1.0, %v552
    %566 = vrot.lane.b32.xlu0 %v563, 96
    %v567 = vpop.permute.xlu0 %566
    %v569 = vmul.f32 %v564, %v567
    %v570 = vmul.f32 %v552, 0.0
    %v571 = vadd.f32 %v569, %v570
    %573 = vrot.lane.b32.xlu0 %v571, 96
    %v574 = vpop.permute.xlu0 %573
    %v575 = vsel %vm155, %v574, 0
    %577 = vmatprep.subr.mxu0 0.0
    %578 = vmatpush1.msra.mxu0 0.0
    %579 = vmatprep.subr.mxu0 0.0
    %580 = vmatpush1.msra.mxu0 0.0
    %581 = vmatprep.subr.mxu0 0.0
    %582 = vmatpush1.msra.mxu0 0.0
    %583 = vmatprep.subr.mxu0 0.0
    %584 = vmatpush1.msra.mxu0 0.0
    %585 = vmatprep.subr.mxu0 0.0
    %586 = vmatpush1.msra.mxu0 0.0
    %587 = vmatprep.subr.mxu0 0.0
    %588 = vmatpush1.msra.mxu0 0.0
    %589 = vmatprep.subr.mxu0 0.0
    %590 = vmatpush1.msra.mxu0 0.0
    %591 = vmatprep.subr.mxu0 0.0
    %592 = vmatpush1.msra.mxu0 0.0
    %593 = vmatprep.subr.mxu0 0.0
    %594 = vmatpush1.msra.mxu0 0.0
    %595 = vmatprep.subr.mxu0 0.0
    %596 = vmatpush1.msra.mxu0 0.0
    %597 = vmatprep.subr.mxu0 0.0
    %598 = vmatpush1.msra.mxu0 0.0
    %599 = vmatprep.subr.mxu0 0.0
    %600 = vmatpush1.msra.mxu0 0.0
    %601 = vmatprep.subr.mxu0 0.0
    %602 = vmatpush1.msra.mxu0 %v50
    %603 = vmatprep.subr.mxu0 0.0
    %604 = vmatpush1.msra.mxu0 %v49
    %605 = vmatprep.subr.mxu0 0.0
    %606 = vmatpush1.msra.mxu0 %v48
    %607 = vmatprep.subr.mxu0 0.0
    %608 = vmatpush1.msra.mxu0 %v47
    %609 = vmatprep.subr.mxu0 0.0
    %610 = vmatpush2.msra.mxu0 0.0
    %611 = vmatprep.subr.mxu0 0.0
    %612 = vmatpush2.msra.mxu0 0.0
    %613 = vmatprep.subr.mxu0 0.0
    %614 = vmatpush2.msra.mxu0 0.0
    %615 = vmatprep.subr.mxu0 0.0
    %616 = vmatpush2.msra.mxu0 0.0
    %617 = vmatprep.subr.mxu0 0.0
    %618 = vmatpush2.msra.mxu0 0.0
    %619 = vmatprep.subr.mxu0 0.0
    %620 = vmatpush2.msra.mxu0 0.0
    %621 = vmatprep.subr.mxu0 0.0
    %622 = vmatpush2.msra.mxu0 0.0
    %623 = vmatprep.subr.mxu0 0.0
    %624 = vmatpush2.msra.mxu0 0.0
    %625 = vmatprep.subr.mxu0 0.0
    %626 = vmatpush2.msra.mxu0 0.0
    %627 = vmatprep.subr.mxu0 0.0
    %628 = vmatpush2.msra.mxu0 0.0
    %629 = vmatprep.subr.mxu0 0.0
    %630 = vmatpush2.msra.mxu0 0.0
    %631 = vmatprep.subr.mxu0 0.0
    %632 = vmatpush2.msra.mxu0 0.0
    %633 = vmatprep.subr.mxu0 0.0
    %634 = vmatpush2.msra.mxu0 0.0
    %635 = vmatprep.subr.mxu0 0.0
    %636 = vmatpush2.msra.mxu0 0.0
    %637 = vmatprep.subr.mxu0 0.0
    %638 = vmatpush2.msra.mxu0 0.0
    %639 = vmatprep.subr.mxu0 0.0
    %640 = vmatpush2.msra.mxu0 0.0
    %641 = vmatprep.mubr.f32.mxu0 0.0
    %642 = vmatmul.mubr.f32.gmra.mxu0 %v575
    %v643 = vpop.f32.mrf.mxu0
    %v644 = vadd.f32 %v472, %v643
    %v645 = vpop.f32.mrf.mxu0
    %646 = vdwg.mxu0
    %v648 = vrot.slane %v644, 6
    %v650 = vadd.f32 %v461, %v648
    %v651 = vxor.u32 %v650, 2147483648
    %v652 = vmul.f32 %v651, 1.442695
    %v653 = vpow.pop %v652
    %v654 = vadd.f32 %v653, 1.0
    %v655 = vrcp.pop %v654
    %v656 = vmul.f32 1.0, %v655
    %657 = vrot.lane.b32.xlu0 %v648, 64
    %v658 = vpop.permute.xlu0 %657
    %v660 = vmul.f32 %v656, %v658
    %662 = vrot.lane.b32.xlu0 %v660, 64
    %v663 = vpop.permute.xlu0 %662
    %v665 = vadd.f32 %v461, %v663
    %v666 = vtanh.pop %v665
    %v667 = vsub.f32 1.0, %v656
    %669 = vrot.lane.b32.xlu0 %v666, 96
    %v670 = vpop.permute.xlu0 %669
    %v672 = vmul.f32 %v667, %v670
    %v673 = vrot.slane %v571, 6
    %v675 = vmul.f32 %v656, %v673
    %v676 = vadd.f32 %v672, %v675
    %v678 = vrot.slane %v676, 2
    %679 = vrot.lane.b32.xlu0 %v678, 96
    %v680 = vpop.permute.xlu0 %679
    %v681 = vsel %vm155, %v680, 0
    %683 = vmatprep.subr.mxu0 0.0
    %684 = vmatpush1.msra.mxu0 0.0
    %685 = vmatprep.subr.mxu0 0.0
    %686 = vmatpush1.msra.mxu0 0.0
    %687 = vmatprep.subr.mxu0 0.0
    %688 = vmatpush1.msra.mxu0 0.0
    %689 = vmatprep.subr.mxu0 0.0
    %690 = vmatpush1.msra.mxu0 0.0
    %691 = vmatprep.subr.mxu0 0.0
    %692 = vmatpush1.msra.mxu0 0.0
    %693 = vmatprep.subr.mxu0 0.0
    %694 = vmatpush1.msra.mxu0 0.0
    %695 = vmatprep.subr.mxu0 0.0
    %696 = vmatpush1.msra.mxu0 0.0
    %697 = vmatprep.subr.mxu0 0.0
    %698 = vmatpush1.msra.mxu0 0.0
    %699 = vmatprep.subr.mxu0 0.0
    %700 = vmatpush1.msra.mxu0 0.0
    %701 = vmatprep.subr.mxu0 0.0
    %702 = vmatpush1.msra.mxu0 0.0
    %703 = vmatprep.subr.mxu0 0.0
    %704 = vmatpush1.msra.mxu0 0.0
    %705 = vmatprep.subr.mxu0 0.0
    %706 = vmatpush1.msra.mxu0 0.0
    %707 = vmatprep.subr.mxu0 0.0
    %708 = vmatpush1.msra.mxu0 %v50
    %709 = vmatprep.subr.mxu0 0.0
    %710 = vmatpush1.msra.mxu0 %v49
    %711 = vmatprep.subr.mxu0 0.0
    %712 = vmatpush1.msra.mxu0 %v48
    %713 = vmatprep.subr.mxu0 0.0
    %714 = vmatpush1.msra.mxu0 %v47
    %715 = vmatprep.subr.mxu0 0.0
    %716 = vmatpush2.msra.mxu0 0.0
    %717 = vmatprep.subr.mxu0 0.0
    %718 = vmatpush2.msra.mxu0 0.0
    %719 = vmatprep.subr.mxu0 0.0
    %720 = vmatpush2.msra.mxu0 0.0
    %721 = vmatprep.subr.mxu0 0.0
    %722 = vmatpush2.msra.mxu0 0.0
    %723 = vmatprep.subr.mxu0 0.0
    %724 = vmatpush2.msra.mxu0 0.0
    %725 = vmatprep.subr.mxu0 0.0
    %726 = vmatpush2.msra.mxu0 0.0
    %727 = vmatprep.subr.mxu0 0.0
    %728 = vmatpush2.msra.mxu0 0.0
    %729 = vmatprep.subr.mxu0 0.0
    %730 = vmatpush2.msra.mxu0 0.0
    %731 = vmatprep.subr.mxu0 0.0
    %732 = vmatpush2.msra.mxu0 0.0
    %733 = vmatprep.subr.mxu0 0.0
    %734 = vmatpush2.msra.mxu0 0.0
    %735 = vmatprep.subr.mxu0 0.0
    %736 = vmatpush2.msra.mxu0 0.0
    %737 = vmatprep.subr.mxu0 0.0
    %738 = vmatpush2.msra.mxu0 0.0
    %739 = vmatprep.subr.mxu0 0.0
    %740 = vmatpush2.msra.mxu0 0.0
    %741 = vmatprep.subr.mxu0 0.0
    %742 = vmatpush2.msra.mxu0 0.0
    %743 = vmatprep.subr.mxu0 0.0
    %744 = vmatpush2.msra.mxu0 0.0
    %745 = vmatprep.subr.mxu0 0.0
    %746 = vmatpush2.msra.mxu0 0.0
    %747 = vmatprep.mubr.f32.mxu0 0.0
    %748 = vmatmul.mubr.f32.gmra.mxu0 %v681
    %v749 = vpop.f32.mrf.mxu0
    %v750 = vadd.f32 %v472, %v749
    %v751 = vpop.f32.mrf.mxu0
    %752 = vdwg.mxu0
    %v754 = vrot.slane %v750, 4
    %v756 = vadd.f32 %v461, %v754
    %v757 = vxor.u32 %v756, 2147483648
    %v758 = vmul.f32 %v757, 1.442695
    %v759 = vpow.pop %v758
    %v760 = vadd.f32 %v759, 1.0
    %v761 = vrcp.pop %v760
    %v762 = vmul.f32 1.0, %v761
    %763 = vrot.lane.b32.xlu0 %v754, 64
    %v764 = vpop.permute.xlu0 %763
    %v766 = vmul.f32 %v762, %v764
    %768 = vrot.lane.b32.xlu0 %v766, 64
    %v769 = vpop.permute.xlu0 %768
    %v771 = vadd.f32 %v461, %v769
    %v772 = vtanh.pop %v771
    %v773 = vsub.f32 1.0, %v762
    %775 = vrot.lane.b32.xlu0 %v772, 96
    %v776 = vpop.permute.xlu0 %775
    %v778 = vmul.f32 %v773, %v776
    %v779 = vrot.slane %v676, 6
    %v781 = vmul.f32 %v762, %v779
    %v782 = vadd.f32 %v778, %v781
    %v784 = vrot.slane %v782, 4
    %785 = vrot.lane.b32.xlu0 %v784, 96
    %v786 = vpop.permute.xlu0 %785
    %v787 = vsel %vm155, %v786, 0
    %789 = vmatprep.subr.mxu0 0.0
    %790 = vmatpush1.msra.mxu0 0.0
    %791 = vmatprep.subr.mxu0 0.0
    %792 = vmatpush1.msra.mxu0 0.0
    %793 = vmatprep.subr.mxu0 0.0
    %794 = vmatpush1.msra.mxu0 0.0
    %795 = vmatprep.subr.mxu0 0.0
    %796 = vmatpush1.msra.mxu0 0.0
    %797 = vmatprep.subr.mxu0 0.0
    %798 = vmatpush1.msra.mxu0 0.0
    %799 = vmatprep.subr.mxu0 0.0
    %800 = vmatpush1.msra.mxu0 0.0
    %801 = vmatprep.subr.mxu0 0.0
    %802 = vmatpush1.msra.mxu0 0.0
    %803 = vmatprep.subr.mxu0 0.0
    %804 = vmatpush1.msra.mxu0 0.0
    %805 = vmatprep.subr.mxu0 0.0
    %806 = vmatpush1.msra.mxu0 0.0
    %807 = vmatprep.subr.mxu0 0.0
    %808 = vmatpush1.msra.mxu0 0.0
    %809 = vmatprep.subr.mxu0 0.0
    %810 = vmatpush1.msra.mxu0 0.0
    %811 = vmatprep.subr.mxu0 0.0
    %812 = vmatpush1.msra.mxu0 0.0
    %813 = vmatprep.subr.mxu0 0.0
    %814 = vmatpush1.msra.mxu0 %v50
    %815 = vmatprep.subr.mxu0 0.0
    %816 = vmatpush1.msra.mxu0 %v49
    %817 = vmatprep.subr.mxu0 0.0
    %818 = vmatpush1.msra.mxu0 %v48
    %819 = vmatprep.subr.mxu0 0.0
    %820 = vmatpush1.msra.mxu0 %v47
    %821 = vmatprep.subr.mxu0 0.0
    %822 = vmatpush2.msra.mxu0 0.0
    %823 = vmatprep.subr.mxu0 0.0
    %824 = vmatpush2.msra.mxu0 0.0
    %825 = vmatprep.subr.mxu0 0.0
    %826 = vmatpush2.msra.mxu0 0.0
    %827 = vmatprep.subr.mxu0 0.0
    %828 = vmatpush2.msra.mxu0 0.0
    %829 = vmatprep.subr.mxu0 0.0
    %830 = vmatpush2.msra.mxu0 0.0
    %831 = vmatprep.subr.mxu0 0.0
    %832 = vmatpush2.msra.mxu0 0.0
    %833 = vmatprep.subr.mxu0 0.0
    %834 = vmatpush2.msra.mxu0 0.0
    %835 = vmatprep.subr.mxu0 0.0
    %836 = vmatpush2.msra.mxu0 0.0
    %837 = vmatprep.subr.mxu0 0.0
    %838 = vmatpush2.msra.mxu0 0.0
    %839 = vmatprep.subr.mxu0 0.0
    %840 = vmatpush2.msra.mxu0 0.0
    %841 = vmatprep.subr.mxu0 0.0
    %842 = vmatpush2.msra.mxu0 0.0
    %843 = vmatprep.subr.mxu0 0.0
    %844 = vmatpush2.msra.mxu0 0.0
    %845 = vmatprep.subr.mxu0 0.0
    %846 = vmatpush2.msra.mxu0 0.0
    %847 = vmatprep.subr.mxu0 0.0
    %848 = vmatpush2.msra.mxu0 0.0
    %849 = vmatprep.subr.mxu0 0.0
    %850 = vmatpush2.msra.mxu0 0.0
    %851 = vmatprep.subr.mxu0 0.0
    %852 = vmatpush2.msra.mxu0 0.0
    %853 = vmatprep.mubr.f32.mxu0 0.0
    %854 = vmatmul.mubr.f32.gmra.mxu0 %v787
    %v855 = vpop.f32.mrf.mxu0
    %v856 = vadd.f32 %v472, %v855
    %v857 = vpop.f32.mrf.mxu0
    %858 = vdwg.mxu0
    %v860 = vrot.slane %v856, 2
    %v862 = vadd.f32 %v461, %v860
    %v863 = vxor.u32 %v862, 2147483648
    %v864 = vmul.f32 %v863, 1.442695
    %v865 = vpow.pop %v864
    %v866 = vadd.f32 %v865, 1.0
    %v867 = vrcp.pop %v866
    %v868 = vmul.f32 1.0, %v867
    %869 = vrot.lane.b32.xlu0 %v860, 64
    %v870 = vpop.permute.xlu0 %869
    %v872 = vmul.f32 %v868, %v870
    %874 = vrot.lane.b32.xlu0 %v872, 64
    %v875 = vpop.permute.xlu0 %874
    %v877 = vadd.f32 %v461, %v875
    %v878 = vtanh.pop %v877
    %v879 = vsub.f32 1.0, %v868
    %881 = vrot.lane.b32.xlu0 %v878, 96
    %v882 = vpop.permute.xlu0 %881
    %v884 = vmul.f32 %v879, %v882
    %v885 = vrot.slane %v782, 6
    %v887 = vmul.f32 %v868, %v885
    %v888 = vadd.f32 %v884, %v887
    %v890 = vrot.slane %v888, 6
    %891 = vrot.lane.b32.xlu0 %v890, 96
    %v892 = vpop.permute.xlu0 %891
    %v893 = vsel %vm155, %v892, 0
    %895 = vmatprep.subr.mxu0 0.0
    %896 = vmatpush1.msra.mxu0 0.0
    %897 = vmatprep.subr.mxu0 0.0
    %898 = vmatpush1.msra.mxu0 0.0
    %899 = vmatprep.subr.mxu0 0.0
    %900 = vmatpush1.msra.mxu0 0.0
    %901 = vmatprep.subr.mxu0 0.0
    %902 = vmatpush1.msra.mxu0 0.0
    %903 = vmatprep.subr.mxu0 0.0
    %904 = vmatpush1.msra.mxu0 0.0
    %905 = vmatprep.subr.mxu0 0.0
    %906 = vmatpush1.msra.mxu0 0.0
    %907 = vmatprep.subr.mxu0 0.0
    %908 = vmatpush1.msra.mxu0 0.0
    %909 = vmatprep.subr.mxu0 0.0
    %910 = vmatpush1.msra.mxu0 0.0
    %911 = vmatprep.subr.mxu0 0.0
    %912 = vmatpush1.msra.mxu0 0.0
    %913 = vmatprep.subr.mxu0 0.0
    %914 = vmatpush1.msra.mxu0 0.0
    %915 = vmatprep.subr.mxu0 0.0
    %916 = vmatpush1.msra.mxu0 0.0
    %917 = vmatprep.subr.mxu0 0.0
    %918 = vmatpush1.msra.mxu0 0.0
    %919 = vmatprep.subr.mxu0 0.0
    %920 = vmatpush1.msra.mxu0 %v50
    %921 = vmatprep.subr.mxu0 0.0
    %922 = vmatpush1.msra.mxu0 %v49
    %923 = vmatprep.subr.mxu0 0.0
    %924 = vmatpush1.msra.mxu0 %v48
    %925 = vmatprep.subr.mxu0 0.0
    %926 = vmatpush1.msra.mxu0 %v47
    %927 = vmatprep.subr.mxu0 0.0
    %928 = vmatpush2.msra.mxu0 0.0
    %929 = vmatprep.subr.mxu0 0.0
    %930 = vmatpush2.msra.mxu0 0.0
    %931 = vmatprep.subr.mxu0 0.0
    %932 = vmatpush2.msra.mxu0 0.0
    %933 = vmatprep.subr.mxu0 0.0
    %934 = vmatpush2.msra.mxu0 0.0
    %935 = vmatprep.subr.mxu0 0.0
    %936 = vmatpush2.msra.mxu0 0.0
    %937 = vmatprep.subr.mxu0 0.0
    %938 = vmatpush2.msra.mxu0 0.0
    %939 = vmatprep.subr.mxu0 0.0
    %940 = vmatpush2.msra.mxu0 0.0
    %941 = vmatprep.subr.mxu0 0.0
    %942 = vmatpush2.msra.mxu0 0.0
    %943 = vmatprep.subr.mxu0 0.0
    %944 = vmatpush2.msra.mxu0 0.0
    %945 = vmatprep.subr.mxu0 0.0
    %946 = vmatpush2.msra.mxu0 0.0
    %947 = vmatprep.subr.mxu0 0.0
    %948 = vmatpush2.msra.mxu0 0.0
    %949 = vmatprep.subr.mxu0 0.0
    %950 = vmatpush2.msra.mxu0 0.0
    %951 = vmatprep.subr.mxu0 0.0
    %952 = vmatpush2.msra.mxu0 0.0
    %953 = vmatprep.subr.mxu0 0.0
    %954 = vmatpush2.msra.mxu0 0.0
    %955 = vmatprep.subr.mxu0 0.0
    %956 = vmatpush2.msra.mxu0 0.0
    %957 = vmatprep.subr.mxu0 0.0
    %958 = vmatpush2.msra.mxu0 0.0
    %959 = vmatprep.mubr.f32.mxu0 0.0
    %960 = vmatmul.mubr.f32.gmra.mxu0 %v893
    %v961 = vpop.f32.mrf.mxu0
    %v962 = vadd.f32 %v472, %v961
    %v963 = vpop.f32.mrf.mxu0
    %964 = vdwg.mxu0
    %v965 = vadd.f32 %v466, %v962
    %v966 = vxor.u32 %v965, 2147483648
    %v967 = vmul.f32 %v966, 1.442695
    %v968 = vpow.pop %v967
    %v969 = vadd.f32 %v968, 1.0
    %v970 = vrcp.pop %v969
    %v971 = vmul.f32 1.0, %v970
    %973 = vrot.lane.b32.xlu0 %v962, 64
    %v974 = vpop.permute.xlu0 %973
    %v976 = vmul.f32 %v971, %v974
    %978 = vrot.lane.b32.xlu0 %v976, 64
    %v979 = vpop.permute.xlu0 %978
    %v981 = vadd.f32 %v466, %v979
    %v982 = vtanh.pop %v981
    %v983 = vsub.f32 1.0, %v971
    %985 = vrot.lane.b32.xlu0 %v982, 96
    %v986 = vpop.permute.xlu0 %985
    %v988 = vmul.f32 %v983, %v986
    %v990 = vmul.f32 %v971, %v890
    %v991 = vadd.f32 %v988, %v990
    %993 = vrot.lane.b32.xlu0 %v991, 96
    %v994 = vpop.permute.xlu0 %993
    %v995 = vsel %vm155, %v994, 0
    %997 = vmatprep.subr.mxu0 0.0
    %998 = vmatpush1.msra.mxu0 0.0
    %999 = vmatprep.subr.mxu0 0.0
    %1000 = vmatpush1.msra.mxu0 0.0
    %1001 = vmatprep.subr.mxu0 0.0
    %1002 = vmatpush1.msra.mxu0 0.0
    %1003 = vmatprep.subr.mxu0 0.0
    %1004 = vmatpush1.msra.mxu0 0.0
    %1005 = vmatprep.subr.mxu0 0.0
    %1006 = vmatpush1.msra.mxu0 0.0
    %1007 = vmatprep.subr.mxu0 0.0
    %1008 = vmatpush1.msra.mxu0 0.0
    %1009 = vmatprep.subr.mxu0 0.0
    %1010 = vmatpush1.msra.mxu0 0.0
    %1011 = vmatprep.subr.mxu0 0.0
    %1012 = vmatpush1.msra.mxu0 0.0
    %1013 = vmatprep.subr.mxu0 0.0
    %1014 = vmatpush1.msra.mxu0 0.0
    %1015 = vmatprep.subr.mxu0 0.0
    %1016 = vmatpush1.msra.mxu0 0.0
    %1017 = vmatprep.subr.mxu0 0.0
    %1018 = vmatpush1.msra.mxu0 0.0
    %1019 = vmatprep.subr.mxu0 0.0
    %1020 = vmatpush1.msra.mxu0 0.0
    %1021 = vmatprep.subr.mxu0 0.0
    %1022 = vmatpush1.msra.mxu0 %v50
    %1023 = vmatprep.subr.mxu0 0.0
    %1024 = vmatpush1.msra.mxu0 %v49
    %1025 = vmatprep.subr.mxu0 0.0
    %1026 = vmatpush1.msra.mxu0 %v48
    %1027 = vmatprep.subr.mxu0 0.0
    %1028 = vmatpush1.msra.mxu0 %v47
    %1029 = vmatprep.subr.mxu0 0.0
    %1030 = vmatpush2.msra.mxu0 0.0
    %1031 = vmatprep.subr.mxu0 0.0
    %1032 = vmatpush2.msra.mxu0 0.0
    %1033 = vmatprep.subr.mxu0 0.0
    %1034 = vmatpush2.msra.mxu0 0.0
    %1035 = vmatprep.subr.mxu0 0.0
    %1036 = vmatpush2.msra.mxu0 0.0
    %1037 = vmatprep.subr.mxu0 0.0
    %1038 = vmatpush2.msra.mxu0 0.0
    %1039 = vmatprep.subr.mxu0 0.0
    %1040 = vmatpush2.msra.mxu0 0.0
    %1041 = vmatprep.subr.mxu0 0.0
    %1042 = vmatpush2.msra.mxu0 0.0
    %1043 = vmatprep.subr.mxu0 0.0
    %1044 = vmatpush2.msra.mxu0 0.0
    %1045 = vmatprep.subr.mxu0 0.0
    %1046 = vmatpush2.msra.mxu0 0.0
    %1047 = vmatprep.subr.mxu0 0.0
    %1048 = vmatpush2.msra.mxu0 0.0
    %1049 = vmatprep.subr.mxu0 0.0
    %1050 = vmatpush2.msra.mxu0 0.0
    %1051 = vmatprep.subr.mxu0 0.0
    %1052 = vmatpush2.msra.mxu0 0.0
    %1053 = vmatprep.subr.mxu0 0.0
    %1054 = vmatpush2.msra.mxu0 0.0
    %1055 = vmatprep.subr.mxu0 0.0
    %1056 = vmatpush2.msra.mxu0 0.0
    %1057 = vmatprep.subr.mxu0 0.0
    %1058 = vmatpush2.msra.mxu0 0.0
    %1059 = vmatprep.subr.mxu0 0.0
    %1060 = vmatpush2.msra.mxu0 0.0
    %1061 = vmatprep.mubr.f32.mxu0 0.0
    %1062 = vmatmul.mubr.f32.gmra.mxu0 %v995
    %v1063 = vpop.f32.mrf.mxu0
    %v1064 = vadd.f32 %v472, %v1063
    %v1065 = vpop.f32.mrf.mxu0
    %1066 = vdwg.mxu0
    %v1068 = vrot.slane %v1064, 6
    %v1070 = vadd.f32 %v466, %v1068
    %v1071 = vxor.u32 %v1070, 2147483648
    %v1072 = vmul.f32 %v1071, 1.442695
    %v1073 = vpow.pop %v1072
    %v1074 = vadd.f32 %v1073, 1.0
    %v1075 = vrcp.pop %v1074
    %v1076 = vmul.f32 1.0, %v1075
    %1077 = vrot.lane.b32.xlu0 %v1068, 64
    %v1078 = vpop.permute.xlu0 %1077
    %v1080 = vmul.f32 %v1076, %v1078
    %1082 = vrot.lane.b32.xlu0 %v1080, 64
    %v1083 = vpop.permute.xlu0 %1082
    %v1085 = vadd.f32 %v466, %v1083
    %v1086 = vtanh.pop %v1085
    %v1087 = vsub.f32 1.0, %v1076
    %1089 = vrot.lane.b32.xlu0 %v1086, 96
    %v1090 = vpop.permute.xlu0 %1089
    %v1092 = vmul.f32 %v1087, %v1090
    %v1093 = vrot.slane %v991, 6
    %v1095 = vmul.f32 %v1076, %v1093
    %v1096 = vadd.f32 %v1092, %v1095
    %v1098 = vrot.slane %v1096, 2
    %1099 = vrot.lane.b32.xlu0 %v1098, 96
    %v1100 = vpop.permute.xlu0 %1099
    %v1101 = vsel %vm155, %v1100, 0
    %1103 = vmatprep.subr.mxu0 0.0
    %1104 = vmatpush1.msra.mxu0 0.0
    %1105 = vmatprep.subr.mxu0 0.0
    %1106 = vmatpush1.msra.mxu0 0.0
    %1107 = vmatprep.subr.mxu0 0.0
    %1108 = vmatpush1.msra.mxu0 0.0
    %1109 = vmatprep.subr.mxu0 0.0
    %1110 = vmatpush1.msra.mxu0 0.0
    %1111 = vmatprep.subr.mxu0 0.0
    %1112 = vmatpush1.msra.mxu0 0.0
    %1113 = vmatprep.subr.mxu0 0.0
    %1114 = vmatpush1.msra.mxu0 0.0
    %1115 = vmatprep.subr.mxu0 0.0
    %1116 = vmatpush1.msra.mxu0 0.0
    %1117 = vmatprep.subr.mxu0 0.0
    %1118 = vmatpush1.msra.mxu0 0.0
    %1119 = vmatprep.subr.mxu0 0.0
    %1120 = vmatpush1.msra.mxu0 0.0
    %1121 = vmatprep.subr.mxu0 0.0
    %1122 = vmatpush1.msra.mxu0 0.0
    %1123 = vmatprep.subr.mxu0 0.0
    %1124 = vmatpush1.msra.mxu0 0.0
    %1125 = vmatprep.subr.mxu0 0.0
    %1126 = vmatpush1.msra.mxu0 0.0
    %1127 = vmatprep.subr.mxu0 0.0
    %1128 = vmatpush1.msra.mxu0 %v50
    %1129 = vmatprep.subr.mxu0 0.0
    %1130 = vmatpush1.msra.mxu0 %v49
    %1131 = vmatprep.subr.mxu0 0.0
    %1132 = vmatpush1.msra.mxu0 %v48
    %1133 = vmatprep.subr.mxu0 0.0
    %1134 = vmatpush1.msra.mxu0 %v47
    %1135 = vmatprep.subr.mxu0 0.0
    %1136 = vmatpush2.msra.mxu0 0.0
    %1137 = vmatprep.subr.mxu0 0.0
    %1138 = vmatpush2.msra.mxu0 0.0
    %1139 = vmatprep.subr.mxu0 0.0
    %1140 = vmatpush2.msra.mxu0 0.0
    %1141 = vmatprep.subr.mxu0 0.0
    %1142 = vmatpush2.msra.mxu0 0.0
    %1143 = vmatprep.subr.mxu0 0.0
    %1144 = vmatpush2.msra.mxu0 0.0
    %1145 = vmatprep.subr.mxu0 0.0
    %1146 = vmatpush2.msra.mxu0 0.0
    %1147 = vmatprep.subr.mxu0 0.0
    %1148 = vmatpush2.msra.mxu0 0.0
    %1149 = vmatprep.subr.mxu0 0.0
    %1150 = vmatpush2.msra.mxu0 0.0
    %1151 = vmatprep.subr.mxu0 0.0
    %1152 = vmatpush2.msra.mxu0 0.0
    %1153 = vmatprep.subr.mxu0 0.0
    %1154 = vmatpush2.msra.mxu0 0.0
    %1155 = vmatprep.subr.mxu0 0.0
    %1156 = vmatpush2.msra.mxu0 0.0
    %1157 = vmatprep.subr.mxu0 0.0
    %1158 = vmatpush2.msra.mxu0 0.0
    %1159 = vmatprep.subr.mxu0 0.0
    %1160 = vmatpush2.msra.mxu0 0.0
    %1161 = vmatprep.subr.mxu0 0.0
    %1162 = vmatpush2.msra.mxu0 0.0
    %1163 = vmatprep.subr.mxu0 0.0
    %1164 = vmatpush2.msra.mxu0 0.0
    %1165 = vmatprep.subr.mxu0 0.0
    %1166 = vmatpush2.msra.mxu0 0.0
    %1167 = vmatprep.mubr.f32.mxu0 0.0
    %1168 = vmatmul.mubr.f32.gmra.mxu0 %v1101
    %v1169 = vpop.f32.mrf.mxu0
    %v1170 = vadd.f32 %v472, %v1169
    %v1171 = vpop.f32.mrf.mxu0
    %1172 = vdwg.mxu0
    %v1174 = vrot.slane %v1170, 4
    %v1176 = vadd.f32 %v466, %v1174
    %v1177 = vxor.u32 %v1176, 2147483648
    %v1178 = vmul.f32 %v1177, 1.442695
    %v1179 = vpow.pop %v1178
    %v1180 = vadd.f32 %v1179, 1.0
    %v1181 = vrcp.pop %v1180
    %v1182 = vmul.f32 1.0, %v1181
    %1183 = vrot.lane.b32.xlu0 %v1174, 64
    %v1184 = vpop.permute.xlu0 %1183
    %v1186 = vmul.f32 %v1182, %v1184
    %1188 = vrot.lane.b32.xlu0 %v1186, 64
    %v1189 = vpop.permute.xlu0 %1188
    %v1191 = vadd.f32 %v466, %v1189
    %v1192 = vtanh.pop %v1191
    %v1193 = vsub.f32 1.0, %v1182
    %1195 = vrot.lane.b32.xlu0 %v1192, 96
    %v1196 = vpop.permute.xlu0 %1195
    %v1198 = vmul.f32 %v1193, %v1196
    %v1199 = vrot.slane %v1096, 6
    %v1201 = vmul.f32 %v1182, %v1199
    %v1202 = vadd.f32 %v1198, %v1201
    %v1204 = vrot.slane %v1202, 4
    %1205 = vrot.lane.b32.xlu0 %v1204, 96
    %v1206 = vpop.permute.xlu0 %1205
    %v1207 = vsel %vm155, %v1206, 0
    %1209 = vmatprep.subr.mxu0 0.0
    %1210 = vmatpush1.msra.mxu0 0.0
    %1211 = vmatprep.subr.mxu0 0.0
    %1212 = vmatpush1.msra.mxu0 0.0
    %1213 = vmatprep.subr.mxu0 0.0
    %1214 = vmatpush1.msra.mxu0 0.0
    %1215 = vmatprep.subr.mxu0 0.0
    %1216 = vmatpush1.msra.mxu0 0.0
    %1217 = vmatprep.subr.mxu0 0.0
    %1218 = vmatpush1.msra.mxu0 0.0
    %1219 = vmatprep.subr.mxu0 0.0
    %1220 = vmatpush1.msra.mxu0 0.0
    %1221 = vmatprep.subr.mxu0 0.0
    %1222 = vmatpush1.msra.mxu0 0.0
    %1223 = vmatprep.subr.mxu0 0.0
    %1224 = vmatpush1.msra.mxu0 0.0
    %1225 = vmatprep.subr.mxu0 0.0
    %1226 = vmatpush1.msra.mxu0 0.0
    %1227 = vmatprep.subr.mxu0 0.0
    %1228 = vmatpush1.msra.mxu0 0.0
    %1229 = vmatprep.subr.mxu0 0.0
    %1230 = vmatpush1.msra.mxu0 0.0
    %1231 = vmatprep.subr.mxu0 0.0
    %1232 = vmatpush1.msra.mxu0 0.0
    %1233 = vmatprep.subr.mxu0 0.0
    %1234 = vmatpush1.msra.mxu0 %v50
    %1235 = vmatprep.subr.mxu0 0.0
    %1236 = vmatpush1.msra.mxu0 %v49
    %1237 = vmatprep.subr.mxu0 0.0
    %1238 = vmatpush1.msra.mxu0 %v48
    %1239 = vmatprep.subr.mxu0 0.0
    %1240 = vmatpush1.msra.mxu0 %v47
    %1241 = vmatprep.subr.mxu0 0.0
    %1242 = vmatpush2.msra.mxu0 0.0
    %1243 = vmatprep.subr.mxu0 0.0
    %1244 = vmatpush2.msra.mxu0 0.0
    %1245 = vmatprep.subr.mxu0 0.0
    %1246 = vmatpush2.msra.mxu0 0.0
    %1247 = vmatprep.subr.mxu0 0.0
    %1248 = vmatpush2.msra.mxu0 0.0
    %1249 = vmatprep.subr.mxu0 0.0
    %1250 = vmatpush2.msra.mxu0 0.0
    %1251 = vmatprep.subr.mxu0 0.0
    %1252 = vmatpush2.msra.mxu0 0.0
    %1253 = vmatprep.subr.mxu0 0.0
    %1254 = vmatpush2.msra.mxu0 0.0
    %1255 = vmatprep.subr.mxu0 0.0
    %1256 = vmatpush2.msra.mxu0 0.0
    %1257 = vmatprep.subr.mxu0 0.0
    %1258 = vmatpush2.msra.mxu0 0.0
    %1259 = vmatprep.subr.mxu0 0.0
    %1260 = vmatpush2.msra.mxu0 0.0
    %1261 = vmatprep.subr.mxu0 0.0
    %1262 = vmatpush2.msra.mxu0 0.0
    %1263 = vmatprep.subr.mxu0 0.0
    %1264 = vmatpush2.msra.mxu0 0.0
    %1265 = vmatprep.subr.mxu0 0.0
    %1266 = vmatpush2.msra.mxu0 0.0
    %1267 = vmatprep.subr.mxu0 0.0
    %1268 = vmatpush2.msra.mxu0 0.0
    %1269 = vmatprep.subr.mxu0 0.0
    %1270 = vmatpush2.msra.mxu0 0.0
    %1271 = vmatprep.subr.mxu0 0.0
    %1272 = vmatpush2.msra.mxu0 0.0
    %1273 = vmatprep.mubr.f32.mxu0 0.0
    %1274 = vmatmul.mubr.f32.gmra.mxu0 %v1207
    %v1275 = vpop.f32.mrf.mxu0
    %v1276 = vadd.f32 %v472, %v1275
    %v1277 = vpop.f32.mrf.mxu0
    %1278 = vdwg.mxu0
    %v1280 = vrot.slane %v1276, 2
    %v1282 = vadd.f32 %v466, %v1280
    %v1283 = vxor.u32 %v1282, 2147483648
    %v1284 = vmul.f32 %v1283, 1.442695
    %v1285 = vpow.pop %v1284
    %v1286 = vadd.f32 %v1285, 1.0
    %v1287 = vrcp.pop %v1286
    %v1288 = vmul.f32 1.0, %v1287
    %1289 = vrot.lane.b32.xlu0 %v1280, 64
    %v1290 = vpop.permute.xlu0 %1289
    %v1292 = vmul.f32 %v1288, %v1290
    %1294 = vrot.lane.b32.xlu0 %v1292, 64
    %v1295 = vpop.permute.xlu0 %1294
    %v1297 = vadd.f32 %v466, %v1295
    %v1298 = vtanh.pop %v1297
    %v1299 = vsub.f32 1.0, %v1288
    %1301 = vrot.lane.b32.xlu0 %v1298, 96
    %v1302 = vpop.permute.xlu0 %1301
    %v1304 = vmul.f32 %v1299, %v1302
    %v1305 = vrot.slane %v1202, 6
    %v1307 = vmul.f32 %v1288, %v1305
    %v1308 = vadd.f32 %v1304, %v1307
    %v1310 = vrot.slane %v1308, 6
    %1311 = vrot.lane.b32.xlu0 %v1310, 96
    %v1312 = vpop.permute.xlu0 %1311
    %v1313 = vsel %vm155, %v1312, 0
    %1315 = vmatprep.subr.mxu0 0.0
    %1316 = vmatpush1.msra.mxu0 0.0
    %1317 = vmatprep.subr.mxu0 0.0
    %1318 = vmatpush1.msra.mxu0 0.0
    %1319 = vmatprep.subr.mxu0 0.0
    %1320 = vmatpush1.msra.mxu0 0.0
    %1321 = vmatprep.subr.mxu0 0.0
    %1322 = vmatpush1.msra.mxu0 0.0
    %1323 = vmatprep.subr.mxu0 0.0
    %1324 = vmatpush1.msra.mxu0 0.0
    %1325 = vmatprep.subr.mxu0 0.0
    %1326 = vmatpush1.msra.mxu0 0.0
    %1327 = vmatprep.subr.mxu0 0.0
    %1328 = vmatpush1.msra.mxu0 0.0
    %1329 = vmatprep.subr.mxu0 0.0
    %1330 = vmatpush1.msra.mxu0 0.0
    %1331 = vmatprep.subr.mxu0 0.0
    %1332 = vmatpush1.msra.mxu0 0.0
    %1333 = vmatprep.subr.mxu0 0.0
    %1334 = vmatpush1.msra.mxu0 0.0
    %1335 = vmatprep.subr.mxu0 0.0
    %1336 = vmatpush1.msra.mxu0 0.0
    %1337 = vmatprep.subr.mxu0 0.0
    %1338 = vmatpush1.msra.mxu0 0.0
    %1339 = vmatprep.subr.mxu0 0.0
    %1340 = vmatpush1.msra.mxu0 %v64
    %1341 = vmatprep.subr.mxu0 0.0
    %1342 = vmatpush1.msra.mxu0 %v63
    %1343 = vmatprep.subr.mxu0 0.0
    %1344 = vmatpush1.msra.mxu0 %v62
    %1345 = vmatprep.subr.mxu0 0.0
    %1346 = vmatpush1.msra.mxu0 %v61
    %1347 = vmatprep.subr.mxu0 0.0
    %1348 = vmatpush2.msra.mxu0 0.0
    %1349 = vmatprep.subr.mxu0 0.0
    %1350 = vmatpush2.msra.mxu0 0.0
    %1351 = vmatprep.subr.mxu0 0.0
    %1352 = vmatpush2.msra.mxu0 0.0
    %1353 = vmatprep.subr.mxu0 0.0
    %1354 = vmatpush2.msra.mxu0 0.0
    %1355 = vmatprep.subr.mxu0 0.0
    %1356 = vmatpush2.msra.mxu0 0.0
    %1357 = vmatprep.subr.mxu0 0.0
    %1358 = vmatpush2.msra.mxu0 0.0
    %1359 = vmatprep.subr.mxu0 0.0
    %1360 = vmatpush2.msra.mxu0 0.0
    %1361 = vmatprep.subr.mxu0 0.0
    %1362 = vmatpush2.msra.mxu0 0.0
    %1363 = vmatprep.subr.mxu0 0.0
    %1364 = vmatpush2.msra.mxu0 0.0
    %1365 = vmatprep.subr.mxu0 0.0
    %1366 = vmatpush2.msra.mxu0 0.0
    %1367 = vmatprep.subr.mxu0 0.0
    %1368 = vmatpush2.msra.mxu0 0.0
    %1369 = vmatprep.subr.mxu0 0.0
    %1370 = vmatpush2.msra.mxu0 0.0
    %1371 = vmatprep.subr.mxu0 0.0
    %1372 = vmatpush2.msra.mxu0 0.0
    %1373 = vmatprep.subr.mxu0 0.0
    %1374 = vmatpush2.msra.mxu0 0.0
    %1375 = vmatprep.subr.mxu0 0.0
    %1376 = vmatpush2.msra.mxu0 0.0
    %1377 = vmatprep.subr.mxu0 0.0
    %1378 = vmatpush2.msra.mxu0 0.0
    %1379 = vmatprep.mubr.f32.mxu0 0.0
    %1380 = vmatmul.mubr.f32.gmra.mxu0 %v1313
    %v1381 = vpop.f32.mrf.mxu0
    %v1382 = vadd.f32 0.0, %v1381
    %v1383 = vpop.f32.mrf.mxu0
    %1384 = vdwg.mxu0
    %v1385 = vadd.f32 %v381, %v1382
    %vm1386 = vcmask 58368
    %v1387 = vsel %vm1386, %v1385, -inf
    %1388 = vmax.xlane.f32.xlu0 %v1387
    %v1389 = vpop.xlane.xlu0 %1388
    %v1390 = vsub.f32 %v1385, %v1389
    %v1391 = vmul.f32 %v1390, 1.442695
    %v1392 = vpow.pop %v1391
    %v1393 = vsel %vm1386, %v1392, 0.0
    %1394 = vadd.xlane.f32.xlu0 %v1393
    %v1395 = vpop.xlane.xlu0 %1394
    %v1396 = vlog2.pop %v1395
    %v1397 = vmul.f32 %v1396, 0.6931472
    %v1398 = vsub.f32 %v1390, %v1397
    %vm1399 = vcmask 64512
    %v1400 = vsel %vm1399, %v1398, %v1385
    %vm1401 = vcmask 320512
    %1402 = vst.msk [vmem:[%s4] sm:$0x3] %vm1401, %v1400
    // Predicated region
    $region22: #{aux_emotion_net_forward.1} parent=1 // pred_check
      _
    $region23: #{aux_emotion_net_forward.1} parent=1 // pred_check_branch
      %1404 = sbr.rel (0) target = $region25
    $region24: #{aux_emotion_net_forward.1} parent=1 // pred_region
      _
    $region25: #{aux_emotion_net_forward.1} parent=1 // pred_fallthru
      _
    // Predicated region
    $region26: #{aux_emotion_net_forward.1} parent=1 // pred_check
      _
    $region27: #{aux_emotion_net_forward.1} parent=1 // pred_check_branch
      %1406 = sbr.rel (0) target = $region29
    $region28: #{aux_emotion_net_forward.1} parent=1 // pred_region
      _
    $region29: #{aux_emotion_net_forward.1} parent=1 // pred_fallthru
      _
    %1407 = vsyncpa [#allocation3], 1

</llo_original>
